<compile_context>
chip_gen: v5e
topology: v5e:2x2
jax: 0.10.0
libtpu: 0.0.40
codegen_flags: <defaults>
</compile_context>

<pallas_src>
import numpy as np

import jax
import jax.numpy as jnp
from jax.experimental import pallas as pl
from jax.experimental.pallas import tpu as pltpu

PAD = 128  # vreg lane width; every fused activation lane dim is padded to this


def cnn_kernel(x_ref, wc1_ref, bc1_ref, wc2_ref, bc2_ref,
               wd_ref, bd_ref, wo_ref, bo_ref, out_ref):
    # x_ref: (Bt, L*E) bf16 -- one row per batch element, time-major flatten.
    x = x_ref[...]

    # conv1 + pool1: one wide matmul (N = 3*PAD), max over the three
    # pool-window-shifted 128-lane slabs (128-aligned static slices are free
    # views), then the channel-tiled bias once.
    c1 = jnp.dot(x, wc1_ref[...], preferred_element_type=jnp.float32)
    c1 = jnp.maximum(jnp.maximum(c1[:, 0 * PAD:1 * PAD],
                                 c1[:, 1 * PAD:2 * PAD]),
                     c1[:, 2 * PAD:3 * PAD])
    p1 = (c1 + bc1_ref[...]).astype(jnp.bfloat16)            # (Bt, PAD)

    # conv2 + pool2: same trick.
    c2 = jnp.dot(p1, wc2_ref[...], preferred_element_type=jnp.float32)
    c2 = jnp.maximum(jnp.maximum(c2[:, 0 * PAD:1 * PAD],
                                 c2[:, 1 * PAD:2 * PAD]),
                     c2[:, 2 * PAD:3 * PAD])
    p2 = (c2 + bc2_ref[...]).astype(jnp.bfloat16)            # (Bt, PAD)

    # dense -> dropout (identity at inference) -> ReLU -> output head.
    d = jnp.dot(p2, wd_ref[...], preferred_element_type=jnp.float32) + bd_ref[...]
    d = jnp.maximum(d, 0.0).astype(jnp.bfloat16)             # (Bt, PAD)
    out_ref[...] = (jnp.dot(d, wo_ref[...], preferred_element_type=jnp.float32)
                    + bo_ref[...])                           # (Bt, PAD) lane-dense


def cnn_forward(emb, wc1, bc1, wc2, bc2, wd, bd, wo, bo, *, out_size,
                block_b=128):
    """emb: (B, L, E) embedded tokens.  Returns (B, out_size) f32 logits.

    block_b guidance per generation: on single-core v5e/v6e prefer one fat tile
    (block_b >= B, per-step overhead amortized); on dual-core v7x keep
    B/block_b >= 4 so each core gets >= 2 pipelined steps.  VMEM footprint per
    tile is < 1 MiB, far under every generation's limit.
    """
    B, L, E = emb.shape
    K1 = L * E
    # bf16 activations: halves the input DMA bytes (dominant HBM term here).
    x = emb.reshape(B, K1).astype(jnp.bfloat16)

    Bt = min(block_b, B)
    if Bt < B:
        Bt = max(8, (Bt // 8) * 8)        # tiled path needs sublane-aligned tiles
    n_tiles = pl.cdiv(B, Bt)
    Bp = n_tiles * Bt
    if Bp != B:                           # remainder batch -> zero-pad last tile
        x = jnp.pad(x, ((0, Bp - B), (0, 0)))

    flops = 2 * Bp * (K1 * 3 * PAD + PAD * 3 * PAD + PAD * PAD + PAD * PAD)
    bytes_accessed = (x.size * 2 + Bp * PAD * 4
                      + (wc1.size + wc2.size + wd.size + wo.size) * 2
                      + (bc1.size + bc2.size + bd.size + bo.size) * 4)

    out = pl.pallas_call(
        cnn_kernel,
        out_shape=jax.ShapeDtypeStruct((Bp, PAD), jnp.float32),
        grid=(n_tiles,),
        in_specs=[
            pl.BlockSpec((Bt, K1), lambda i: (i, 0)),
            # Weights / biases: constant index maps -> fetched once and kept
            # resident in VMEM across all grid steps.
            # (pipeline_mode=pl.Buffered(1) would drop the redundant second
            #  buffer (~150 KB); left at default for lowering portability.)
            pl.BlockSpec(wc1.shape, lambda i: (0, 0)),
            pl.BlockSpec(bc1.shape, lambda i: (0, 0)),
            pl.BlockSpec(wc2.shape, lambda i: (0, 0)),
            pl.BlockSpec(bc2.shape, lambda i: (0, 0)),
            pl.BlockSpec(wd.shape, lambda i: (0, 0)),
            pl.BlockSpec(bd.shape, lambda i: (0, 0)),
            pl.BlockSpec(wo.shape, lambda i: (0, 0)),
            pl.BlockSpec(bo.shape, lambda i: (0, 0)),
        ],
        out_specs=pl.BlockSpec((Bt, PAD), lambda i: (i, 0)),
        compiler_params=pltpu.CompilerParams(
            dimension_semantics=("parallel",)),
        cost_estimate=pl.CostEstimate(
            flops=int(flops), transcendentals=0,
            bytes_accessed=int(bytes_accessed)),
    )(x, wc1, bc1, wc2, bc2, wd, bd, wo, bo)

    # Kernel stores a lane-dense (Bt, 128) slab; slice the real logits here.
    return out[:B, :out_size]


def build_kernel_weights(w1_t, b1, w2_t, b2, wd_t, bd, wo_t, bo, max_len,
                         out_size):
    """Expand torch-shaped params into the kernel's fused, lane-padded weights.

    Activation lane layout inside the kernel is time-major: lane = t*C + c,
    zero-padded to PAD lanes.  wc1/wc2 hold, per pool-window offset s, a
    Toeplitz band of the conv weights in 128-lane slab s of the N axis, so
    pool(conv(x)) + bias == max_s((x @ wc)[:, s*PAD:(s+1)*PAD]) + tiled_bias
    for the valid lanes.  All pad / out-of-range rows and columns are zero,
    which also neutralizes the garbage pool lanes of the previous stage.
    """
    L = max_len
    E = w1_t.shape[-1]
    L1, L1p = L - 2, L - 4
    L2, L2p = L - 6, L - 8
    assert L1 * 5 <= PAD and L2 * 10 <= PAD and 100 <= PAD and out_size <= PAD

    w1 = np.asarray(w1_t)[:, 0]            # (5, 3, E)   Conv2d(1,5,(3,E))
    w2 = np.asarray(w2_t)[..., 0]          # (10, 5, 3)  Conv2d(5,10,(3,1))
    wd = np.asarray(wd_t)                  # (100, 10*L2p), torch cols = c*L2p + t
    wo = np.asarray(wo_t)                  # (out_size, 100)

    K1 = L * E
    # conv1 + pool1: one wide banded weight, 3 pool-shifted slabs along N.
    wc1 = np.zeros((K1, 3 * PAD), np.float32)
    for s in range(3):                     # pool1 window offset
        for t in range(L1):                # output lane block (time)
            tc = t + s                     # conv1 time this column computes
            if tc >= L1:
                continue                   # would only feed garbage pool lanes
            for k in range(3):             # conv1 tap over time
                wc1[(tc + k) * E:(tc + k + 1) * E,
                    s * PAD + t * 5: s * PAD + (t + 1) * 5] = w1[:, k, :].T

    # conv2 + pool2 likewise; K padded to PAD (rows for garbage pool1 lanes
    # and pad lanes stay zero).
    wc2 = np.zeros((PAD, 3 * PAD), np.float32)
    for s in range(3):
        for t in range(L2):
            tc = t + s
            if tc >= L2:
                continue
            for k in range(3):
                wc2[(tc + k) * 5:(tc + k + 1) * 5,
                    s * PAD + t * 10: s * PAD + (t + 1) * 10] = w2[:, :, k].T

    # dense: kernel flatten is time-major (t*10+c); torch flatten is
    # channel-major (c*L2p+t).  Rows >= L2p*10 (garbage/pad lanes) stay zero.
    wd_k = np.zeros((PAD, PAD), np.float32)
    wd_k[:L2p * 10, :100] = np.transpose(
        wd.reshape(100, 10, L2p), (2, 1, 0)).reshape(L2p * 10, 100)

    wo_k = np.zeros((PAD, PAD), np.float32)
    wo_k[:100, :out_size] = wo.T

    bc1 = np.zeros((1, PAD), np.float32)
    bc1[0, :L1 * 5] = np.tile(np.asarray(b1), L1)
    bc2 = np.zeros((1, PAD), np.float32)
    bc2[0, :L2 * 10] = np.tile(np.asarray(b2), L2)
    bd_k = np.zeros((1, PAD), np.float32)
    bd_k[0, :100] = np.asarray(bd)
    bo_k = np.zeros((1, PAD), np.float32)
    bo_k[0, :out_size] = np.asarray(bo)

    bf16 = lambda a: jnp.asarray(a, dtype=jnp.bfloat16)
    f32 = lambda a: jnp.asarray(a, dtype=jnp.float32)
    return (bf16(wc1), f32(bc1),
            bf16(wc2), f32(bc2),
            bf16(wd_k), f32(bd_k),
            bf16(wo_k), f32(bo_k))


def reference_forward(emb, w1_t, b1, w2_t, b2, wd_t, bd, wo_t, bo):
    """Plain-JAX f32 reference following the PyTorch NCHW semantics exactly."""
    B, L, E = emb.shape
    L1, L1p = L - 2, L - 4
    L2, L2p = L - 6, L - 8
    win1 = jnp.stack([emb[:, k:k + L1] for k in range(3)], axis=2)     # (B,L1,3,E)
    c1 = jnp.einsum('btke,cke->bct', win1, w1_t[:, 0]) + b1[None, :, None]
    p1 = jnp.max(jnp.stack([c1[:, :, k:k + L1p] for k in range(3)], 0), 0)
    win2 = jnp.stack([p1[:, :, k:k + L2] for k in range(3)], axis=-1)  # (B,5,L2,3)
    c2 = jnp.einsum('bitk,oik->bot', win2, w2_t[..., 0]) + b2[None, :, None]
    p2 = jnp.max(jnp.stack([c2[:, :, k:k + L2p] for k in range(3)], 0), 0)
    flat = p2.reshape(B, -1)                                           # channel-major
    d = jnp.maximum(flat @ wd_t.T + bd, 0.0)
    return d @ wo_t.T + bo


if __name__ == "__main__":
    # Small model shapes; batch chosen so the kernel runs 2 batch tiles of 128
    # (one per TensorCore on v7x; on single-core v5e/v6e pass block_b=B for one
    # fat tile).
    B, vocab_size, E, max_len, out_size = 256, 50, 8, 16, 4
    L2p = max_len - 8
    dense_in = 10 * L2p

    key = jax.random.PRNGKey(0)
    ks = jax.random.split(key, 10)

    def xavier(k, shape, fan_in, fan_out):
        std = (2.0 / (fan_in + fan_out)) ** 0.5
        return std * jax.random.normal(k, shape, dtype=jnp.float32)

    # Parameters in PyTorch-native shapes.  (Biases made non-zero here so the
    # fused bias tiling / lane padding is actually exercised.)
    emb_table = 0.1 * jax.random.normal(ks[0], (vocab_size, E), dtype=jnp.float32)
    w1_t = xavier(ks[1], (5, 1, 3, E), 3 * E, 5)             # Conv2d(1,5,(3,E))
    b1 = 0.05 * jax.random.normal(ks[6], (5,), dtype=jnp.float32)
    w2_t = xavier(ks[2], (10, 5, 3, 1), 5 * 3, 10)           # Conv2d(5,10,(3,1))
    b2 = 0.05 * jax.random.normal(ks[7], (10,), dtype=jnp.float32)
    wd_t = xavier(ks[3], (100, dense_in), dense_in, 100)     # Linear(dense_in,100)
    bd = 0.05 * jax.random.normal(ks[8], (100,), dtype=jnp.float32)
    wo_t = xavier(ks[4], (out_size, 100), 100, out_size)     # Linear(100,out_size)
    bo = 0.05 * jax.random.normal(ks[9], (out_size,), dtype=jnp.float32)

    # Wrapper-side fused / permuted / lane-padded weights (NumPy glue).
    params = build_kernel_weights(w1_t, b1, w2_t, b2, wd_t, bd, wo_t, bo,
                                  max_len, out_size)

    # Token ids and embedding lookup.
    # TODO(synk): the embedding gather stays in plain JAX; fusing it in-kernel
    # (jnp.take on a resident table, or a one-hot folded into wc1) costs more
    # MXU work / lowering risk than the ~B*L*E*2-byte HBM saving at this scale.
    words = jax.random.randint(ks[5], (B, max_len), 0, vocab_size)
    embedded = emb_table[words]                              # (B, L, E)

    out = cnn_forward(embedded, *params, out_size=out_size, block_b=128)
    out = jax.block_until_ready(out)

    ref = reference_forward(embedded, w1_t, b1, w2_t, b2, wd_t, bd, wo_t, bo)
    assert out.shape == (B, out_size)
    max_err = float(jnp.max(jnp.abs(out - ref)))
    assert jnp.allclose(out, ref, rtol=2e-2, atol=2e-2), f"max abs err {max_err}"

    print("KERNEL_OK")
</pallas_src>

<mosaic_0001>
module attributes {stable_mosaic.version = 11 : i64} {
  func.func @cnn_kernel(%arg0: i32, %arg1: memref<128x128xbf16, #tpu.memory_space<vmem>>, %arg2: memref<128x384xbf16, #tpu.memory_space<vmem>>, %arg3: memref<1x128xf32, #tpu.memory_space<vmem>>, %arg4: memref<128x384xbf16, #tpu.memory_space<vmem>>, %arg5: memref<1x128xf32, #tpu.memory_space<vmem>>, %arg6: memref<128x128xbf16, #tpu.memory_space<vmem>>, %arg7: memref<1x128xf32, #tpu.memory_space<vmem>>, %arg8: memref<128x128xbf16, #tpu.memory_space<vmem>>, %arg9: memref<1x128xf32, #tpu.memory_space<vmem>>, %arg10: memref<128x128xf32, #tpu.memory_space<vmem>>) attributes {dimension_semantics = [#tpu.dimension_semantics<parallel>], iteration_bounds = array<i64: 2>, scalar_prefetch = 0 : i64, scratch_operands = 0 : i64, tpu.core_type = #tpu.core_type<tc>, window_params = [{transform_indices = @transform_0, window_bounds = array<i64: 128, 128>}, {pipeline_mode = #tpu.pipeline_mode<synchronous>, transform_indices = @transform_1, window_bounds = array<i64: 128, 384>}, {pipeline_mode = #tpu.pipeline_mode<synchronous>, transform_indices = @transform_2, window_bounds = array<i64: 1, 128>}, {pipeline_mode = #tpu.pipeline_mode<synchronous>, transform_indices = @transform_3, window_bounds = array<i64: 128, 384>}, {pipeline_mode = #tpu.pipeline_mode<synchronous>, transform_indices = @transform_4, window_bounds = array<i64: 1, 128>}, {pipeline_mode = #tpu.pipeline_mode<synchronous>, transform_indices = @transform_5, window_bounds = array<i64: 128, 128>}, {pipeline_mode = #tpu.pipeline_mode<synchronous>, transform_indices = @transform_6, window_bounds = array<i64: 1, 128>}, {pipeline_mode = #tpu.pipeline_mode<synchronous>, transform_indices = @transform_7, window_bounds = array<i64: 128, 128>}, {pipeline_mode = #tpu.pipeline_mode<synchronous>, transform_indices = @transform_8, window_bounds = array<i64: 1, 128>}, {transform_indices = @transform_9, window_bounds = array<i64: 128, 128>}]} {
    %c0 = arith.constant 0 : index
    %c0_0 = arith.constant 0 : index
    %0 = vector.load %arg1[%c0, %c0_0] : memref<128x128xbf16, #tpu.memory_space<vmem>>, vector<128x128xbf16>
    %c0_1 = arith.constant 0 : index
    %c0_2 = arith.constant 0 : index
    %1 = vector.load %arg2[%c0_1, %c0_2] : memref<128x384xbf16, #tpu.memory_space<vmem>>, vector<128x384xbf16>
    %cst = arith.constant dense<0.000000e+00> : vector<128x384xf32>
    %2 = tpu.matmul %0, %1, %cst {dimension_numbers = #tpu.dot_dimension_numbers<[1], [0], [0], [1], [0, 0, 1, 1], [], []>} : vector<128x128xbf16>, vector<128x384xbf16>, vector<128x384xf32> -> vector<128x384xf32>
    %3 = vector.extract_strided_slice %2 {offsets = [0, 0], sizes = [128, 128], strides = [1, 1]} : vector<128x384xf32> to vector<128x128xf32>
    %4 = vector.extract_strided_slice %2 {offsets = [0, 128], sizes = [128, 128], strides = [1, 1]} : vector<128x384xf32> to vector<128x128xf32>
    %5 = arith.maximumf %3, %4 : vector<128x128xf32>
    %6 = vector.extract_strided_slice %2 {offsets = [0, 256], sizes = [128, 128], strides = [1, 1]} : vector<128x384xf32> to vector<128x128xf32>
    %7 = arith.maximumf %5, %6 : vector<128x128xf32>
    %c0_3 = arith.constant 0 : index
    %c0_4 = arith.constant 0 : index
    %8 = vector.load %arg3[%c0_3, %c0_4] : memref<1x128xf32, #tpu.memory_space<vmem>>, vector<1x128xf32>
    %9 = vector.broadcast %8 : vector<1x128xf32> to vector<128x128xf32>
    %10 = arith.addf %7, %9 : vector<128x128xf32>
    %11 = arith.truncf %10 : vector<128x128xf32> to vector<128x128xbf16>
    %c0_5 = arith.constant 0 : index
    %c0_6 = arith.constant 0 : index
    %12 = vector.load %arg4[%c0_5, %c0_6] : memref<128x384xbf16, #tpu.memory_space<vmem>>, vector<128x384xbf16>
    %cst_7 = arith.constant dense<0.000000e+00> : vector<128x384xf32>
    %13 = tpu.matmul %11, %12, %cst_7 {dimension_numbers = #tpu.dot_dimension_numbers<[1], [0], [0], [1], [0, 0, 1, 1], [], []>} : vector<128x128xbf16>, vector<128x384xbf16>, vector<128x384xf32> -> vector<128x384xf32>
    %14 = vector.extract_strided_slice %13 {offsets = [0, 0], sizes = [128, 128], strides = [1, 1]} : vector<128x384xf32> to vector<128x128xf32>
    %15 = vector.extract_strided_slice %13 {offsets = [0, 128], sizes = [128, 128], strides = [1, 1]} : vector<128x384xf32> to vector<128x128xf32>
    %16 = arith.maximumf %14, %15 : vector<128x128xf32>
    %17 = vector.extract_strided_slice %13 {offsets = [0, 256], sizes = [128, 128], strides = [1, 1]} : vector<128x384xf32> to vector<128x128xf32>
    %18 = arith.maximumf %16, %17 : vector<128x128xf32>
    %c0_8 = arith.constant 0 : index
    %c0_9 = arith.constant 0 : index
    %19 = vector.load %arg5[%c0_8, %c0_9] : memref<1x128xf32, #tpu.memory_space<vmem>>, vector<1x128xf32>
    %20 = vector.broadcast %19 : vector<1x128xf32> to vector<128x128xf32>
    %21 = arith.addf %18, %20 : vector<128x128xf32>
    %22 = arith.truncf %21 : vector<128x128xf32> to vector<128x128xbf16>
    %c0_10 = arith.constant 0 : index
    %c0_11 = arith.constant 0 : index
    %23 = vector.load %arg6[%c0_10, %c0_11] : memref<128x128xbf16, #tpu.memory_space<vmem>>, vector<128x128xbf16>
    %cst_12 = arith.constant dense<0.000000e+00> : vector<128x128xf32>
    %24 = tpu.matmul %22, %23, %cst_12 {dimension_numbers = #tpu.dot_dimension_numbers<[1], [0], [0], [1], [0, 0, 1, 1], [], []>} : vector<128x128xbf16>, vector<128x128xbf16>, vector<128x128xf32> -> vector<128x128xf32>
    %c0_13 = arith.constant 0 : index
    %c0_14 = arith.constant 0 : index
    %25 = vector.load %arg7[%c0_13, %c0_14] : memref<1x128xf32, #tpu.memory_space<vmem>>, vector<1x128xf32>
    %26 = vector.broadcast %25 : vector<1x128xf32> to vector<128x128xf32>
    %27 = arith.addf %24, %26 : vector<128x128xf32>
    %cst_15 = arith.constant 0.000000e+00 : f32
    %28 = vector.broadcast %cst_15 : f32 to vector<128x128xf32>
    %29 = arith.maximumf %27, %28 : vector<128x128xf32>
    %30 = arith.truncf %29 : vector<128x128xf32> to vector<128x128xbf16>
    %c0_16 = arith.constant 0 : index
    %c0_17 = arith.constant 0 : index
    %31 = vector.load %arg8[%c0_16, %c0_17] : memref<128x128xbf16, #tpu.memory_space<vmem>>, vector<128x128xbf16>
    %cst_18 = arith.constant dense<0.000000e+00> : vector<128x128xf32>
    %32 = tpu.matmul %30, %31, %cst_18 {dimension_numbers = #tpu.dot_dimension_numbers<[1], [0], [0], [1], [0, 0, 1, 1], [], []>} : vector<128x128xbf16>, vector<128x128xbf16>, vector<128x128xf32> -> vector<128x128xf32>
    %c0_19 = arith.constant 0 : index
    %c0_20 = arith.constant 0 : index
    %33 = vector.load %arg9[%c0_19, %c0_20] : memref<1x128xf32, #tpu.memory_space<vmem>>, vector<1x128xf32>
    %34 = vector.broadcast %33 : vector<1x128xf32> to vector<128x128xf32>
    %35 = arith.addf %32, %34 : vector<128x128xf32>
    %c0_21 = arith.constant 0 : index
    %c0_22 = arith.constant 0 : index
    %36 = vector.load %arg10[%c0_21, %c0_22] : memref<128x128xf32, #tpu.memory_space<vmem>>, vector<128x128xf32>
    tpu.vector_store %arg10[%c0_21, %c0_22], %35 {strides = array<i32>} : memref<128x128xf32, #tpu.memory_space<vmem>>, vector<128x128xf32>,
    return
  }
  func.func @transform_0(%arg0: i32) -> (i32, i32) {
    %c0_i32 = arith.constant 0 : i32
    %c0_i32_0 = arith.constant 0 : i32
    return %arg0, %c0_i32 : i32, i32
  }
  func.func @transform_1(%arg0: i32) -> (i32, i32) {
    %c0_i32 = arith.constant 0 : i32
    %c0_i32_0 = arith.constant 0 : i32
    %c0_i32_1 = arith.constant 0 : i32
    return %c0_i32, %c0_i32_0 : i32, i32
  }
  func.func @transform_2(%arg0: i32) -> (i32, i32) {
    %c0_i32 = arith.constant 0 : i32
    %c0_i32_0 = arith.constant 0 : i32
    %c0_i32_1 = arith.constant 0 : i32
    return %c0_i32, %c0_i32_0 : i32, i32
  }
  func.func @transform_3(%arg0: i32) -> (i32, i32) {
    %c0_i32 = arith.constant 0 : i32
    %c0_i32_0 = arith.constant 0 : i32
    %c0_i32_1 = arith.constant 0 : i32
    return %c0_i32, %c0_i32_0 : i32, i32
  }
  func.func @transform_4(%arg0: i32) -> (i32, i32) {
    %c0_i32 = arith.constant 0 : i32
    %c0_i32_0 = arith.constant 0 : i32
    %c0_i32_1 = arith.constant 0 : i32
    return %c0_i32, %c0_i32_0 : i32, i32
  }
  func.func @transform_5(%arg0: i32) -> (i32, i32) {
    %c0_i32 = arith.constant 0 : i32
    %c0_i32_0 = arith.constant 0 : i32
    %c0_i32_1 = arith.constant 0 : i32
    return %c0_i32, %c0_i32_0 : i32, i32
  }
  func.func @transform_6(%arg0: i32) -> (i32, i32) {
    %c0_i32 = arith.constant 0 : i32
    %c0_i32_0 = arith.constant 0 : i32
    %c0_i32_1 = arith.constant 0 : i32
    return %c0_i32, %c0_i32_0 : i32, i32
  }
  func.func @transform_7(%arg0: i32) -> (i32, i32) {
    %c0_i32 = arith.constant 0 : i32
    %c0_i32_0 = arith.constant 0 : i32
    %c0_i32_1 = arith.constant 0 : i32
    return %c0_i32, %c0_i32_0 : i32, i32
  }
  func.func @transform_8(%arg0: i32) -> (i32, i32) {
    %c0_i32 = arith.constant 0 : i32
    %c0_i32_0 = arith.constant 0 : i32
    %c0_i32_1 = arith.constant 0 : i32
    return %c0_i32, %c0_i32_0 : i32, i32
  }
  func.func @transform_9(%arg0: i32) -> (i32, i32) {
    %c0_i32 = arith.constant 0 : i32
    %c0_i32_0 = arith.constant 0 : i32
    return %arg0, %c0_i32 : i32, i32
  }
}

</mosaic_0001>

<llo_original>
// kernel: tpu_custom_call.1
$region0: #{tpu_custom_call.1}
  #allocation0 [shape = 'u32[]', space=smem, size = 0x4, offset = 0x4, fixed_abs, tag = 'smem constant byte address 0x4 - core index']
  #allocation1 [shape = 'u32[72,128]{1,0:T(1,128)}', space=vmem, size = 0x9000, scoped, tag = 'internal scratch']
  %s0 = inlined_call_operand.hbm [shape: bf16[256,128], index: 0, kind: input, shape index: {}]
  %s1 = inlined_call_operand.hbm [shape: bf16[128,384], index: 1, kind: input, shape index: {}]
  %s2 = inlined_call_operand.vmem [shape: f32[1,128], index: 2, kind: input, shape index: {}]
  %s3 = inlined_call_operand.hbm [shape: bf16[128,384], index: 3, kind: input, shape index: {}]
  %s4 = inlined_call_operand.vmem [shape: f32[1,128], index: 4, kind: input, shape index: {}]
  %s5 = inlined_call_operand.hbm [shape: bf16[128,128], index: 5, kind: input, shape index: {}]
  %s6 = inlined_call_operand.vmem [shape: f32[1,128], index: 6, kind: input, shape index: {}]
  %s7 = inlined_call_operand.hbm [shape: bf16[128,128], index: 7, kind: input, shape index: {}]
  %s8 = inlined_call_operand.vmem [shape: f32[1,128], index: 8, kind: input, shape index: {}]
  %s9 = inlined_call_operand.hbm [shape: f32[256,128], index: 9, kind: output, shape index: {}]
  %s10 = sld [smem:[#allocation0]]
  $region89: #{tpu_custom_call.1} parent=0
    _
  %s12 = ssub.s32 1, %s10
  %s13 = scalar_select 0, %s12, %s10
  $region1: #{tpu_custom_call.1} parent=0
    #allocation2 [shape = 'u8[65536]{0}', space=vmem, size = 0x10000, scoped, tag = 'input window, operand 0']
    #allocation3 [shape = 's32[2]{0}', space=sflag, size = 0x8, scoped, tag = 'scoped memory for tpu_custom_call.1']
    #allocation4 [shape = 's32[2]{0}', space=sflag, size = 0x8, scoped, tag = 'scoped memory for tpu_custom_call.1']
    #allocation5 [shape = 'u8[98304]{0}', space=vmem, size = 0x18000, scoped, tag = 'input window, operand 1, single buffered']
    #allocation6 [shape = 's32[1]{0}', space=sflag, size = 0x4, scoped, tag = 'scoped memory for tpu_custom_call.1']
    #allocation7 [shape = 'u8[98304]{0}', space=vmem, size = 0x18000, scoped, tag = 'input window, operand 3, single buffered']
    #allocation8 [shape = 'u8[32768]{0}', space=vmem, size = 0x8000, scoped, tag = 'input window, operand 5, single buffered']
    #allocation9 [shape = 's32[1]{0}', space=sflag, size = 0x4, scoped, tag = 'scoped memory for tpu_custom_call.1']
    #allocation10 [shape = 'u8[32768]{0}', space=vmem, size = 0x8000, scoped, tag = 'input window, operand 7, single buffered']
    #allocation11 [shape = 'u8[131072]{0}', space=vmem, size = 0x20000, scoped, tag = 'output window, operand 0']
    %14 = vsyncpa [#allocation3], 0
    %s15 = scalar_lea.sflag [#allocation3], 1
    %16 = vsyncpa %s15, 0
    %17 = vsyncpa [#allocation6], 0
    %18 = vsyncpa [#allocation9], 0
    %19 = vsyncpa [#allocation4], 0
    %s20 = scalar_lea.sflag [#allocation4], 1
    %21 = vsyncpa %s20, 0
    loop: start=0, step=1, limit=4
    $region2: #{tpu_custom_call.1} parent=1 // loop_pre_header
      _
    $region3: #{tpu_custom_call.1} parent=1 // loop_header
      %s23 = sphi 0, %s27
      %p24 = scmp.ge.s32.totalorder %s23, 4
      %s33 = sphi 0, %s35
      %s36 = sphi 0, %s33
      %s37 = sphi 0, %s36
      %s53 = sphi 0, %s37
      %s57 = sphi 0, %s57
      %s59 = sphi 0, %s57
      %s60 = sphi 0, %s59
      %s74 = sphi 0, %s60
      %s78 = sphi 0, %s78
      %s80 = sphi 0, %s78
      %s81 = sphi 0, %s80
      %s95 = sphi 0, %s81
      %s99 = sphi 0, %s99
      %s101 = sphi 0, %s99
      %s102 = sphi 0, %s101
      %s116 = sphi 0, %s102
      %s120 = sphi 0, %s120
      %s122 = sphi 0, %s120
      %s123 = sphi 0, %s122
      %s137 = sphi 0, %s123
      %s141 = sphi 0, %s141
      %s143 = sphi 0, %s141
      %s144 = sphi 0, %s143
      %s158 = sphi 0, %s144
      %s162 = sphi 0, %s162
      %s164 = sphi 0, %s162
      %s165 = sphi 0, %s164
      %s179 = sphi 0, %s165
      %s183 = sphi 0, %s183
      %s185 = sphi 0, %s183
      %s186 = sphi 0, %s185
      %s200 = sphi 0, %s186
      %s204 = sphi 0, %s204
      %s206 = sphi 0, %s204
      %s207 = sphi 0, %s206
      %s221 = sphi 0, %s207
      %s227 = sphi 0, %s229
      %s230 = sphi 0, %s227
      %s231 = sphi 0, %s230
      %s247 = sphi 0, %s231
    $region4: #{tpu_custom_call.1} parent=1 // loop_header_branch
      %26 = sbr.rel (%p24) target = $region8
    $region5: #{tpu_custom_call.1} parent=1 // loop_body
      %s28 = ssub.s32 %s23, 1
      %s29 = ssub.s32 %s23, 2
      %s30 = sadd.s32 %s23, 1
      %s31 = ssub.s32 %s23, %s30
      %p32 = scmp.eq.s32.totalorder %s31, 0
      %s34 = sadd.s32 %s33, 1
      %s35 = scalar_select %p32, %s33, %s34
      %p38 = pneg %p32
      %p39 = scmp.eq.s32.totalorder %s23, 1
      %p40 = por %p38, %p39
      %p41 = scmp.ne.s32.totalorder %s33, %s36
      %p42 = scmp.eq.s32.totalorder %s23, 0
      %p43 = por %p41, %p42
      %p44 = scmp.ne.s32.totalorder %s33, %s36
      %p45 = scmp.eq.s32.totalorder %s28, 1
      %p46 = por %p44, %p45
      %p47 = scmp.ne.s32.totalorder %s36, %s37
      %p48 = scmp.eq.s32.totalorder %s28, 0
      %p49 = por %p47, %p48
      %p50 = scmp.ne.s32.totalorder %s36, %s37
      %p51 = scmp.eq.s32.totalorder %s29, 1
      %p52 = por %p50, %p51
      %p54 = scmp.ne.s32.totalorder %s37, %s53
      %p55 = scmp.eq.s32.totalorder %s29, 0
      %p56 = por %p54, %p55
      %s58 = sadd.s32 %s57, 1
      %p61 = scmp.eq.s32.totalorder %s23, 1
      %p62 = scmp.ne.s32.totalorder %s57, %s59
      %p63 = scmp.eq.s32.totalorder %s23, 0
      %p64 = por %p62, %p63
      %p65 = scmp.ne.s32.totalorder %s57, %s59
      %p66 = scmp.eq.s32.totalorder %s28, 1
      %p67 = por %p65, %p66
      %p68 = scmp.ne.s32.totalorder %s59, %s60
      %p69 = scmp.eq.s32.totalorder %s28, 0
      %p70 = por %p68, %p69
      %p71 = scmp.ne.s32.totalorder %s59, %s60
      %p72 = scmp.eq.s32.totalorder %s29, 1
      %p73 = por %p71, %p72
      %p75 = scmp.ne.s32.totalorder %s60, %s74
      %p76 = scmp.eq.s32.totalorder %s29, 0
      %p77 = por %p75, %p76
      %s79 = sadd.s32 %s78, 1
      %p82 = scmp.eq.s32.totalorder %s23, 1
      %p83 = scmp.ne.s32.totalorder %s78, %s80
      %p84 = scmp.eq.s32.totalorder %s23, 0
      %p85 = por %p83, %p84
      %p86 = scmp.ne.s32.totalorder %s78, %s80
      %p87 = scmp.eq.s32.totalorder %s28, 1
      %p88 = por %p86, %p87
      %p89 = scmp.ne.s32.totalorder %s80, %s81
      %p90 = scmp.eq.s32.totalorder %s28, 0
      %p91 = por %p89, %p90
      %p92 = scmp.ne.s32.totalorder %s80, %s81
      %p93 = scmp.eq.s32.totalorder %s29, 1
      %p94 = por %p92, %p93
      %p96 = scmp.ne.s32.totalorder %s81, %s95
      %p97 = scmp.eq.s32.totalorder %s29, 0
      %p98 = por %p96, %p97
      %s100 = sadd.s32 %s99, 1
      %p103 = scmp.eq.s32.totalorder %s23, 1
      %p104 = scmp.ne.s32.totalorder %s99, %s101
      %p105 = scmp.eq.s32.totalorder %s23, 0
      %p106 = por %p104, %p105
      %p107 = scmp.ne.s32.totalorder %s99, %s101
      %p108 = scmp.eq.s32.totalorder %s28, 1
      %p109 = por %p107, %p108
      %p110 = scmp.ne.s32.totalorder %s101, %s102
      %p111 = scmp.eq.s32.totalorder %s28, 0
      %p112 = por %p110, %p111
      %p113 = scmp.ne.s32.totalorder %s101, %s102
      %p114 = scmp.eq.s32.totalorder %s29, 1
      %p115 = por %p113, %p114
      %p117 = scmp.ne.s32.totalorder %s102, %s116
      %p118 = scmp.eq.s32.totalorder %s29, 0
      %p119 = por %p117, %p118
      %s121 = sadd.s32 %s120, 1
      %p124 = scmp.eq.s32.totalorder %s23, 1
      %p125 = scmp.ne.s32.totalorder %s120, %s122
      %p126 = scmp.eq.s32.totalorder %s23, 0
      %p127 = por %p125, %p126
      %p128 = scmp.ne.s32.totalorder %s120, %s122
      %p129 = scmp.eq.s32.totalorder %s28, 1
      %p130 = por %p128, %p129
      %p131 = scmp.ne.s32.totalorder %s122, %s123
      %p132 = scmp.eq.s32.totalorder %s28, 0
      %p133 = por %p131, %p132
      %p134 = scmp.ne.s32.totalorder %s122, %s123
      %p135 = scmp.eq.s32.totalorder %s29, 1
      %p136 = por %p134, %p135
      %p138 = scmp.ne.s32.totalorder %s123, %s137
      %p139 = scmp.eq.s32.totalorder %s29, 0
      %p140 = por %p138, %p139
      %s142 = sadd.s32 %s141, 1
      %p145 = scmp.eq.s32.totalorder %s23, 1
      %p146 = scmp.ne.s32.totalorder %s141, %s143
      %p147 = scmp.eq.s32.totalorder %s23, 0
      %p148 = por %p146, %p147
      %p149 = scmp.ne.s32.totalorder %s141, %s143
      %p150 = scmp.eq.s32.totalorder %s28, 1
      %p151 = por %p149, %p150
      %p152 = scmp.ne.s32.totalorder %s143, %s144
      %p153 = scmp.eq.s32.totalorder %s28, 0
      %p154 = por %p152, %p153
      %p155 = scmp.ne.s32.totalorder %s143, %s144
      %p156 = scmp.eq.s32.totalorder %s29, 1
      %p157 = por %p155, %p156
      %p159 = scmp.ne.s32.totalorder %s144, %s158
      %p160 = scmp.eq.s32.totalorder %s29, 0
      %p161 = por %p159, %p160
      %s163 = sadd.s32 %s162, 1
      %p166 = scmp.eq.s32.totalorder %s23, 1
      %p167 = scmp.ne.s32.totalorder %s162, %s164
      %p168 = scmp.eq.s32.totalorder %s23, 0
      %p169 = por %p167, %p168
      %p170 = scmp.ne.s32.totalorder %s162, %s164
      %p171 = scmp.eq.s32.totalorder %s28, 1
      %p172 = por %p170, %p171
      %p173 = scmp.ne.s32.totalorder %s164, %s165
      %p174 = scmp.eq.s32.totalorder %s28, 0
      %p175 = por %p173, %p174
      %p176 = scmp.ne.s32.totalorder %s164, %s165
      %p177 = scmp.eq.s32.totalorder %s29, 1
      %p178 = por %p176, %p177
      %p180 = scmp.ne.s32.totalorder %s165, %s179
      %p181 = scmp.eq.s32.totalorder %s29, 0
      %p182 = por %p180, %p181
      %s184 = sadd.s32 %s183, 1
      %p187 = scmp.eq.s32.totalorder %s23, 1
      %p188 = scmp.ne.s32.totalorder %s183, %s185
      %p189 = scmp.eq.s32.totalorder %s23, 0
      %p190 = por %p188, %p189
      %p191 = scmp.ne.s32.totalorder %s183, %s185
      %p192 = scmp.eq.s32.totalorder %s28, 1
      %p193 = por %p191, %p192
      %p194 = scmp.ne.s32.totalorder %s185, %s186
      %p195 = scmp.eq.s32.totalorder %s28, 0
      %p196 = por %p194, %p195
      %p197 = scmp.ne.s32.totalorder %s185, %s186
      %p198 = scmp.eq.s32.totalorder %s29, 1
      %p199 = por %p197, %p198
      %p201 = scmp.ne.s32.totalorder %s186, %s200
      %p202 = scmp.eq.s32.totalorder %s29, 0
      %p203 = por %p201, %p202
      %s205 = sadd.s32 %s204, 1
      %p208 = scmp.eq.s32.totalorder %s23, 1
      %p209 = scmp.ne.s32.totalorder %s204, %s206
      %p210 = scmp.eq.s32.totalorder %s23, 0
      %p211 = por %p209, %p210
      %p212 = scmp.ne.s32.totalorder %s204, %s206
      %p213 = scmp.eq.s32.totalorder %s28, 1
      %p214 = por %p212, %p213
      %p215 = scmp.ne.s32.totalorder %s206, %s207
      %p216 = scmp.eq.s32.totalorder %s28, 0
      %p217 = por %p215, %p216
      %p218 = scmp.ne.s32.totalorder %s206, %s207
      %p219 = scmp.eq.s32.totalorder %s29, 1
      %p220 = por %p218, %p219
      %p222 = scmp.ne.s32.totalorder %s207, %s221
      %p223 = scmp.eq.s32.totalorder %s29, 0
      %p224 = por %p222, %p223
      %s225 = ssub.s32 %s23, %s30
      %p226 = scmp.eq.s32.totalorder %s225, 0
      %s228 = sadd.s32 %s227, 1
      %s229 = scalar_select %p226, %s227, %s228
      %p232 = pneg %p226
      %p233 = scmp.eq.s32.totalorder %s23, 1
      %p234 = por %p232, %p233
      %p235 = scmp.ne.s32.totalorder %s227, %s230
      %p236 = scmp.eq.s32.totalorder %s23, 0
      %p237 = por %p235, %p236
      %p238 = scmp.ne.s32.totalorder %s227, %s230
      %p239 = scmp.eq.s32.totalorder %s28, 1
      %p240 = por %p238, %p239
      %p241 = scmp.ne.s32.totalorder %s230, %s231
      %p242 = scmp.eq.s32.totalorder %s28, 0
      %p243 = por %p241, %p242
      %p244 = scmp.ne.s32.totalorder %s230, %s231
      %p245 = scmp.eq.s32.totalorder %s29, 1
      %p246 = por %p244, %p245
      %p248 = scmp.ne.s32.totalorder %s231, %s247
      %p249 = scmp.eq.s32.totalorder %s29, 0
      %p250 = por %p248, %p249
      %p251 = scmp.le.s32.totalorder 1, %s23
      %p252 = scmp.lt.s32.totalorder %s23, 3
      %p253 = pnand %p251, %p252
      %p254 = pneg %p253
      // Predicated region
      $region9: #{tpu_custom_call.1} parent=5 // pred_check
        _
      $region10: #{tpu_custom_call.1} parent=5 // pred_check_branch
        %256 = sbr.rel (%p253) target = $region12
      $region11: #{tpu_custom_call.1} parent=5 // pred_region
        %s257 = ssub.s32 %s23, 1
        // Predicated region
        $region13: #{tpu_custom_call.1} parent=11 // pred_check
          %p258 = pneg %p70
        $region14: #{tpu_custom_call.1} parent=11 // pred_check_branch
          %260 = sbr.rel (%p258) target = $region16
        $region15: #{tpu_custom_call.1} parent=11 // pred_region
          %262 = vsyncadd [#allocation6], 0
          %s263 = sshll.u32 %s1, 4
          %s264 = int_to_ptr.hbm [resolvable:$true] %s263
          %s265 = sshll.u32 [#allocation5], 4
          %s266 = int_to_ptr.vmem [resolvable:$true] %s265
          %271 = dma.hbm_to_vmem [thread:$0]  %s264, 3072, %s266, [#allocation6], 192, 192, 12
        $region16: #{tpu_custom_call.1} parent=11 // pred_fallthru
          _
        // Predicated region
        $region17: #{tpu_custom_call.1} parent=11 // pred_check
          %p272 = pneg %p91
        $region18: #{tpu_custom_call.1} parent=11 // pred_check_branch
          %274 = sbr.rel (%p272) target = $region20
        $region19: #{tpu_custom_call.1} parent=11 // pred_region
          _
        $region20: #{tpu_custom_call.1} parent=11 // pred_fallthru
          _
        // Predicated region
        $region21: #{tpu_custom_call.1} parent=11 // pred_check
          %p275 = pneg %p112
        $region22: #{tpu_custom_call.1} parent=11 // pred_check_branch
          %277 = sbr.rel (%p275) target = $region24
        $region23: #{tpu_custom_call.1} parent=11 // pred_region
          %279 = vsyncadd [#allocation6], 0
          %s280 = sshll.u32 %s3, 4
          %s281 = int_to_ptr.hbm [resolvable:$true] %s280
          %s282 = sshll.u32 [#allocation7], 4
          %s283 = int_to_ptr.vmem [resolvable:$true] %s282
          %288 = dma.hbm_to_vmem [thread:$0]  %s281, 3072, %s283, [#allocation6], 192, 192, 12
        $region24: #{tpu_custom_call.1} parent=11 // pred_fallthru
          _
        // Predicated region
        $region25: #{tpu_custom_call.1} parent=11 // pred_check
          %p289 = pneg %p133
        $region26: #{tpu_custom_call.1} parent=11 // pred_check_branch
          %291 = sbr.rel (%p289) target = $region28
        $region27: #{tpu_custom_call.1} parent=11 // pred_region
          _
        $region28: #{tpu_custom_call.1} parent=11 // pred_fallthru
          _
        // Predicated region
        $region29: #{tpu_custom_call.1} parent=11 // pred_check
          %p292 = pneg %p154
        $region30: #{tpu_custom_call.1} parent=11 // pred_check_branch
          %294 = sbr.rel (%p292) target = $region32
        $region31: #{tpu_custom_call.1} parent=11 // pred_region
          %296 = vsyncadd [#allocation9], 0
          %s297 = sshll.u32 %s5, 4
          %s298 = int_to_ptr.hbm [resolvable:$true] %s297
          %s299 = sshll.u32 [#allocation8], 4
          %s300 = int_to_ptr.vmem [resolvable:$true] %s299
          %305 = dma.hbm_to_vmem [thread:$0]  %s298, 1024, %s300, [#allocation9], 64, 64, 4
        $region32: #{tpu_custom_call.1} parent=11 // pred_fallthru
          _
        // Predicated region
        $region33: #{tpu_custom_call.1} parent=11 // pred_check
          %p306 = pneg %p175
        $region34: #{tpu_custom_call.1} parent=11 // pred_check_branch
          %308 = sbr.rel (%p306) target = $region36
        $region35: #{tpu_custom_call.1} parent=11 // pred_region
          _
        $region36: #{tpu_custom_call.1} parent=11 // pred_fallthru
          _
        // Predicated region
        $region37: #{tpu_custom_call.1} parent=11 // pred_check
          %p309 = pneg %p196
        $region38: #{tpu_custom_call.1} parent=11 // pred_check_branch
          %311 = sbr.rel (%p309) target = $region40
        $region39: #{tpu_custom_call.1} parent=11 // pred_region
          %313 = vsyncadd [#allocation9], 0
          %s314 = sshll.u32 %s7, 4
          %s315 = int_to_ptr.hbm [resolvable:$true] %s314
          %s316 = sshll.u32 [#allocation10], 4
          %s317 = int_to_ptr.vmem [resolvable:$true] %s316
          %322 = dma.hbm_to_vmem [thread:$0]  %s315, 1024, %s317, [#allocation9], 64, 64, 4
        $region40: #{tpu_custom_call.1} parent=11 // pred_fallthru
          _
        // Predicated region
        $region41: #{tpu_custom_call.1} parent=11 // pred_check
          %p323 = pneg %p217
        $region42: #{tpu_custom_call.1} parent=11 // pred_check_branch
          %325 = sbr.rel (%p323) target = $region44
        $region43: #{tpu_custom_call.1} parent=11 // pred_region
          _
        $region44: #{tpu_custom_call.1} parent=11 // pred_fallthru
          _
      $region12: #{tpu_custom_call.1} parent=5 // pred_fallthru
        _
      %p326 = scmp.lt.s32.totalorder %s23, 2
      // Predicated region
      $region45: #{tpu_custom_call.1} parent=5 // pred_check
        %p327 = pneg %p326
      $region46: #{tpu_custom_call.1} parent=5 // pred_check_branch
        %329 = sbr.rel (%p327) target = $region48
      $region47: #{tpu_custom_call.1} parent=5 // pred_region
        // Predicated region
        $region49: #{tpu_custom_call.1} parent=47 // pred_check
          %p330 = pneg %p43
        $region50: #{tpu_custom_call.1} parent=47 // pred_check_branch
          %332 = sbr.rel (%p330) target = $region52
        $region51: #{tpu_custom_call.1} parent=47 // pred_region
          %s333 = sand.u32 %s33, 1
          %s334 = scalar_lea.sflag [#allocation3], %s333
          %s335 = sand.u32 %s33, 1
          %s336 = smul.addr %s335, 64
          %s337 = scalar_lea.vmem [#allocation2], %s336
          %s338 = smul.u32 16, %s23
          %340 = vsyncadd %s334, 0
          %s341 = smul.addr %s338, 4
          %s342 = scalar_lea.hbm %s0, %s341
          %s343 = sshll.u32 %s342, 4
          %s344 = int_to_ptr.hbm [resolvable:$true] %s343
          %s345 = sshll.u32 %s337, 4
          %s346 = int_to_ptr.vmem [resolvable:$true] %s345
          %351 = dma.hbm_to_vmem [thread:$0]  %s344, 1024, %s346, %s334, 64, 64, 4
        $region52: #{tpu_custom_call.1} parent=47 // pred_fallthru
          _
      $region48: #{tpu_custom_call.1} parent=5 // pred_fallthru
        _
      %p352 = scmp.le.s32.totalorder 1, %s23
      %p353 = scmp.lt.s32.totalorder %s23, 3
      %p354 = pnand %p352, %p353
      %p355 = pneg %p354
      // Predicated region
      $region53: #{tpu_custom_call.1} parent=5 // pred_check
        _
      $region54: #{tpu_custom_call.1} parent=5 // pred_check_branch
        %357 = sbr.rel (%p354) target = $region56
      $region55: #{tpu_custom_call.1} parent=5 // pred_region
        %s358 = ssub.s32 %s23, 1
        %s359 = sand.u32 %s36, 1
        %s360 = scalar_lea.sflag [#allocation3], %s359
        %s361 = sand.u32 %s36, 1
        %s362 = smul.addr %s361, 64
        %s363 = scalar_lea.vmem [#allocation2], %s362
        // Predicated region
        $region57: #{tpu_custom_call.1} parent=55 // pred_check
          %p364 = pneg %p49
        $region58: #{tpu_custom_call.1} parent=55 // pred_check_branch
          %366 = sbr.rel (%p364) target = $region60
        $region59: #{tpu_custom_call.1} parent=55 // pred_region
          %368 = dma.done %s360, 1024
        $region60: #{tpu_custom_call.1} parent=55 // pred_fallthru
          _
        // Predicated region
        $region61: #{tpu_custom_call.1} parent=55 // pred_check
          %p369 = pneg %p70
        $region62: #{tpu_custom_call.1} parent=55 // pred_check_branch
          %371 = sbr.rel (%p369) target = $region64
        $region63: #{tpu_custom_call.1} parent=55 // pred_region
          %373 = dma.done [#allocation6], 3072
        $region64: #{tpu_custom_call.1} parent=55 // pred_fallthru
          _
        // Predicated region
        $region65: #{tpu_custom_call.1} parent=55 // pred_check
          %p374 = pneg %p112
        $region66: #{tpu_custom_call.1} parent=55 // pred_check_branch
          %376 = sbr.rel (%p374) target = $region68
        $region67: #{tpu_custom_call.1} parent=55 // pred_region
          %378 = dma.done [#allocation6], 3072
        $region68: #{tpu_custom_call.1} parent=55 // pred_fallthru
          _
        // Predicated region
        $region69: #{tpu_custom_call.1} parent=55 // pred_check
          %p379 = pneg %p154
        $region70: #{tpu_custom_call.1} parent=55 // pred_check_branch
          %381 = sbr.rel (%p379) target = $region72
        $region71: #{tpu_custom_call.1} parent=55 // pred_region
          %383 = dma.done [#allocation9], 1024
        $region72: #{tpu_custom_call.1} parent=55 // pred_fallthru
          _
        // Predicated region
        $region73: #{tpu_custom_call.1} parent=55 // pred_check
          %p384 = pneg %p196
        $region74: #{tpu_custom_call.1} parent=55 // pred_check_branch
          %386 = sbr.rel (%p384) target = $region76
        $region75: #{tpu_custom_call.1} parent=55 // pred_region
          %388 = dma.done [#allocation9], 1024
        $region76: #{tpu_custom_call.1} parent=55 // pred_fallthru
          _
        %s389 = sand.u32 %s36, 1
        %s390 = scalar_lea.sflag [#allocation3], %s389
        %s391 = sand.u32 %s36, 1
        %s392 = smul.addr %s391, 64
        %s393 = scalar_lea.vmem [#allocation2], %s392
        %p394 = pneg %p49
        %p395 = pneg %p46
        %p396 = pneg %p70
        %p397 = pneg %p67
        %p398 = pneg %p91
        %p399 = pneg %p88
        %p400 = pneg %p112
        %p401 = pneg %p109
        %p402 = pneg %p133
        %p403 = pneg %p130
        %p404 = pneg %p154
        %p405 = pneg %p151
        %p406 = pneg %p175
        %p407 = pneg %p172
        %p408 = pneg %p196
        %p409 = pneg %p193
        %p410 = pneg %p217
        %p411 = pneg %p214
        %p412 = pneg %p243
        %p413 = pneg %p240
        %s414 = sand.u32 %s230, 1
        %s415 = scalar_lea.sflag [#allocation4], %s414
        %s416 = sand.u32 %s230, 1
        %s417 = smul.addr %s416, 128
        %s418 = scalar_lea.vmem [#allocation11], %s417
        %s419 = smul.u32 16, %s28
        %s420 = smul.u32 16, %s28
        %v421 = vld [vmem:[%s363] sm:$0xf]
        %v422 = vld [vmem:[%s363 + $0x4] sm:$0xf]
        %v423 = vld [vmem:[%s363 + $0x8] sm:$0xf]
        %v424 = vld [vmem:[%s363 + $0xc] sm:$0xf]
        %v425 = vld [vmem:[%s363 + $0x10] sm:$0xf]
        %v426 = vld [vmem:[%s363 + $0x14] sm:$0xf]
        %v427 = vld [vmem:[%s363 + $0x18] sm:$0xf]
        %v428 = vld [vmem:[%s363 + $0x1c] sm:$0xf]
        %v429 = vld [vmem:[%s363 + $0x20] sm:$0xf]
        %v430 = vld [vmem:[%s363 + $0x24] sm:$0xf]
        %v431 = vld [vmem:[%s363 + $0x28] sm:$0xf]
        %v432 = vld [vmem:[%s363 + $0x2c] sm:$0xf]
        %v433 = vld [vmem:[%s363 + $0x30] sm:$0xf]
        %v434 = vld [vmem:[%s363 + $0x34] sm:$0xf]
        %v435 = vld [vmem:[%s363 + $0x38] sm:$0xf]
        %v436 = vld [vmem:[%s363 + $0x3c] sm:$0xf]
        %v437 = vld [vmem:[#allocation5] sm:$0xff]
        %v438 = vld [vmem:[#allocation5 + $0x8] sm:$0xf]
        %v439 = vld [vmem:[#allocation5 + $0xc] sm:$0xff]
        %v440 = vld [vmem:[#allocation5 + $0x14] sm:$0xf]
        %v441 = vld [vmem:[#allocation5 + $0x18] sm:$0xff]
        %v442 = vld [vmem:[#allocation5 + $0x20] sm:$0xf]
        %v443 = vld [vmem:[#allocation5 + $0x24] sm:$0xff]
        %v444 = vld [vmem:[#allocation5 + $0x2c] sm:$0xf]
        %v445 = vld [vmem:[#allocation5 + $0x30] sm:$0xff]
        %v446 = vld [vmem:[#allocation5 + $0x38] sm:$0xf]
        %v447 = vld [vmem:[#allocation5 + $0x3c] sm:$0xff]
        %v448 = vld [vmem:[#allocation5 + $0x44] sm:$0xf]
        %v449 = vld [vmem:[#allocation5 + $0x48] sm:$0xff]
        %v450 = vld [vmem:[#allocation5 + $0x50] sm:$0xf]
        %v451 = vld [vmem:[#allocation5 + $0x54] sm:$0xff]
        %v452 = vld [vmem:[#allocation5 + $0x5c] sm:$0xf]
        %v453 = vld [vmem:[#allocation5 + $0x60] sm:$0xff]
        %v454 = vld [vmem:[#allocation5 + $0x68] sm:$0xf]
        %v455 = vld [vmem:[#allocation5 + $0x6c] sm:$0xff]
        %v456 = vld [vmem:[#allocation5 + $0x74] sm:$0xf]
        %v457 = vld [vmem:[#allocation5 + $0x78] sm:$0xff]
        %v458 = vld [vmem:[#allocation5 + $0x80] sm:$0xf]
        %v459 = vld [vmem:[#allocation5 + $0x84] sm:$0xff]
        %v460 = vld [vmem:[#allocation5 + $0x8c] sm:$0xf]
        %v461 = vld [vmem:[#allocation5 + $0x90] sm:$0xff]
        %v462 = vld [vmem:[#allocation5 + $0x98] sm:$0xf]
        %v463 = vld [vmem:[#allocation5 + $0x9c] sm:$0xff]
        %v464 = vld [vmem:[#allocation5 + $0xa4] sm:$0xf]
        %v465 = vld [vmem:[#allocation5 + $0xa8] sm:$0xff]
        %v466 = vld [vmem:[#allocation5 + $0xb0] sm:$0xf]
        %v467 = vld [vmem:[#allocation5 + $0xb4] sm:$0xff]
        %v468 = vld [vmem:[#allocation5 + $0xbc] sm:$0xf]
        %v485 = vunpack.c.l.b16 %v421
        %v486 = vunpack.c.l.b16 %v422
        %v487 = vunpack.c.l.b16 %v423
        %v488 = vunpack.c.l.b16 %v424
        %v489 = vunpack.c.l.b16 %v425
        %v490 = vunpack.c.l.b16 %v426
        %v491 = vunpack.c.l.b16 %v427
        %v492 = vunpack.c.l.b16 %v428
        %v493 = vunpack.c.l.b16 %v429
        %v494 = vunpack.c.l.b16 %v430
        %v495 = vunpack.c.l.b16 %v431
        %v496 = vunpack.c.l.b16 %v432
        %v497 = vunpack.c.l.b16 %v433
        %v498 = vunpack.c.l.b16 %v434
        %v499 = vunpack.c.l.b16 %v435
        %v500 = vunpack.c.l.b16 %v436
        %v501 = vpack.c.b16 %v486, %v485
        %v502 = vpack.c.b16 %v488, %v487
        %v503 = vpack.c.b16 %v490, %v489
        %v504 = vpack.c.b16 %v492, %v491
        %v505 = vpack.c.b16 %v494, %v493
        %v506 = vpack.c.b16 %v496, %v495
        %v507 = vpack.c.b16 %v498, %v497
        %v508 = vpack.c.b16 %v500, %v499
        %v549 = vunpack.c.l.b16 %v437
        %v550 = vunpack.c.h.b16 %v437
        %v551 = vunpack.c.l.b16 %v438
        %v552 = vunpack.c.l.b16 %v439
        %v553 = vunpack.c.h.b16 %v439
        %v554 = vunpack.c.l.b16 %v440
        %v555 = vunpack.c.l.b16 %v441
        %v556 = vunpack.c.h.b16 %v441
        %v557 = vunpack.c.l.b16 %v442
        %v558 = vunpack.c.l.b16 %v443
        %v559 = vunpack.c.h.b16 %v443
        %v560 = vunpack.c.l.b16 %v444
        %v561 = vunpack.c.l.b16 %v445
        %v562 = vunpack.c.h.b16 %v445
        %v563 = vunpack.c.l.b16 %v446
        %v564 = vunpack.c.l.b16 %v447
        %v565 = vunpack.c.h.b16 %v447
        %v566 = vunpack.c.l.b16 %v448
        %v567 = vunpack.c.l.b16 %v449
        %v568 = vunpack.c.h.b16 %v449
        %v569 = vunpack.c.l.b16 %v450
        %v570 = vunpack.c.l.b16 %v451
        %v571 = vunpack.c.h.b16 %v451
        %v572 = vunpack.c.l.b16 %v452
        %v573 = vunpack.c.l.b16 %v453
        %v574 = vunpack.c.h.b16 %v453
        %v575 = vunpack.c.l.b16 %v454
        %v576 = vunpack.c.l.b16 %v455
        %v577 = vunpack.c.h.b16 %v455
        %v578 = vunpack.c.l.b16 %v456
        %v579 = vunpack.c.l.b16 %v457
        %v580 = vunpack.c.h.b16 %v457
        %v581 = vunpack.c.l.b16 %v458
        %v582 = vunpack.c.l.b16 %v459
        %v583 = vunpack.c.h.b16 %v459
        %v584 = vunpack.c.l.b16 %v460
        %v585 = vunpack.c.l.b16 %v461
        %v586 = vunpack.c.h.b16 %v461
        %v587 = vunpack.c.l.b16 %v462
        %v588 = vunpack.c.l.b16 %v463
        %v589 = vunpack.c.h.b16 %v463
        %v590 = vunpack.c.l.b16 %v464
        %v591 = vunpack.c.l.b16 %v465
        %v592 = vunpack.c.h.b16 %v465
        %v593 = vunpack.c.l.b16 %v466
        %v594 = vunpack.c.l.b16 %v467
        %v595 = vunpack.c.h.b16 %v467
        %v596 = vunpack.c.l.b16 %v468
        %v597 = vpack.c.b16 %v552, %v549
        %v598 = vpack.c.b16 %v553, %v550
        %v599 = vpack.c.b16 %v554, %v551
        %v600 = vpack.c.b16 %v558, %v555
        %v601 = vpack.c.b16 %v559, %v556
        %v602 = vpack.c.b16 %v560, %v557
        %v603 = vpack.c.b16 %v564, %v561
        %v604 = vpack.c.b16 %v565, %v562
        %v605 = vpack.c.b16 %v566, %v563
        %v606 = vpack.c.b16 %v570, %v567
        %v607 = vpack.c.b16 %v571, %v568
        %v608 = vpack.c.b16 %v572, %v569
        %v609 = vpack.c.b16 %v576, %v573
        %v610 = vpack.c.b16 %v577, %v574
        %v611 = vpack.c.b16 %v578, %v575
        %v612 = vpack.c.b16 %v582, %v579
        %v613 = vpack.c.b16 %v583, %v580
        %v614 = vpack.c.b16 %v584, %v581
        %v615 = vpack.c.b16 %v588, %v585
        %v616 = vpack.c.b16 %v589, %v586
        %v617 = vpack.c.b16 %v590, %v587
        %v618 = vpack.c.b16 %v594, %v591
        %v619 = vpack.c.b16 %v595, %v592
        %v620 = vpack.c.b16 %v596, %v593
        %645 = vmatpush.bf16.msra.mxu0 %v618
        %646 = vmatpush.bf16.msra.mxu0 %v615
        %647 = vmatpush.bf16.msra.mxu0 %v612
        %648 = vmatpush.bf16.msra.mxu0 %v609
        %649 = vmatpush.bf16.msra.mxu0 %v606
        %650 = vmatpush.bf16.msra.mxu0 %v603
        %651 = vmatpush.bf16.msra.mxu0 %v600
        %652 = vmatpush.bf16.msra.mxu0 %v597
        %653 = vmatmul.bf16.gmra.mxu0 %v501
        %v654 = vpop.f32.mrf.mxu0
        %v655 = vadd.f32 0.0, %v654
        %v656 = vpop.f32.mrf.mxu0
        %v657 = vadd.f32 0.0, %v656
        %658 = vmatmul.bf16.gmra.mxu0 %v502
        %v659 = vpop.f32.mrf.mxu0
        %v660 = vadd.f32 0.0, %v659
        %v661 = vpop.f32.mrf.mxu0
        %v662 = vadd.f32 0.0, %v661
        %663 = vmatmul.bf16.gmra.mxu0 %v503
        %v664 = vpop.f32.mrf.mxu0
        %v665 = vadd.f32 0.0, %v664
        %v666 = vpop.f32.mrf.mxu0
        %v667 = vadd.f32 0.0, %v666
        %668 = vmatmul.bf16.gmra.mxu0 %v504
        %v669 = vpop.f32.mrf.mxu0
        %v670 = vadd.f32 0.0, %v669
        %v671 = vpop.f32.mrf.mxu0
        %v672 = vadd.f32 0.0, %v671
        %673 = vmatmul.bf16.gmra.mxu0 %v505
        %v674 = vpop.f32.mrf.mxu0
        %v675 = vadd.f32 0.0, %v674
        %v676 = vpop.f32.mrf.mxu0
        %v677 = vadd.f32 0.0, %v676
        %678 = vmatmul.bf16.gmra.mxu0 %v506
        %v679 = vpop.f32.mrf.mxu0
        %v680 = vadd.f32 0.0, %v679
        %v681 = vpop.f32.mrf.mxu0
        %v682 = vadd.f32 0.0, %v681
        %683 = vmatmul.bf16.gmra.mxu0 %v507
        %v684 = vpop.f32.mrf.mxu0
        %v685 = vadd.f32 0.0, %v684
        %v686 = vpop.f32.mrf.mxu0
        %v687 = vadd.f32 0.0, %v686
        %688 = vmatmul.bf16.gmra.mxu0 %v508
        %v689 = vpop.f32.mrf.mxu0
        %v690 = vadd.f32 0.0, %v689
        %v691 = vpop.f32.mrf.mxu0
        %v692 = vadd.f32 0.0, %v691
        %693 = vdwg.mxu0
        %694 = vmatpush.bf16.msra.mxu0 %v619
        %695 = vmatpush.bf16.msra.mxu0 %v616
        %696 = vmatpush.bf16.msra.mxu0 %v613
        %697 = vmatpush.bf16.msra.mxu0 %v610
        %698 = vmatpush.bf16.msra.mxu0 %v607
        %699 = vmatpush.bf16.msra.mxu0 %v604
        %700 = vmatpush.bf16.msra.mxu0 %v601
        %701 = vmatpush.bf16.msra.mxu0 %v598
        %702 = vmatmul.bf16.gmra.mxu0 %v501
        %v703 = vpop.f32.mrf.mxu0
        %v704 = vadd.f32 0.0, %v703
        %v705 = vpop.f32.mrf.mxu0
        %v706 = vadd.f32 0.0, %v705
        %707 = vmatmul.bf16.gmra.mxu0 %v502
        %v708 = vpop.f32.mrf.mxu0
        %v709 = vadd.f32 0.0, %v708
        %v710 = vpop.f32.mrf.mxu0
        %v711 = vadd.f32 0.0, %v710
        %712 = vmatmul.bf16.gmra.mxu0 %v503
        %v713 = vpop.f32.mrf.mxu0
        %v714 = vadd.f32 0.0, %v713
        %v715 = vpop.f32.mrf.mxu0
        %v716 = vadd.f32 0.0, %v715
        %717 = vmatmul.bf16.gmra.mxu0 %v504
        %v718 = vpop.f32.mrf.mxu0
        %v719 = vadd.f32 0.0, %v718
        %v720 = vpop.f32.mrf.mxu0
        %v721 = vadd.f32 0.0, %v720
        %722 = vmatmul.bf16.gmra.mxu0 %v505
        %v723 = vpop.f32.mrf.mxu0
        %v724 = vadd.f32 0.0, %v723
        %v725 = vpop.f32.mrf.mxu0
        %v726 = vadd.f32 0.0, %v725
        %727 = vmatmul.bf16.gmra.mxu0 %v506
        %v728 = vpop.f32.mrf.mxu0
        %v729 = vadd.f32 0.0, %v728
        %v730 = vpop.f32.mrf.mxu0
        %v731 = vadd.f32 0.0, %v730
        %732 = vmatmul.bf16.gmra.mxu0 %v507
        %v733 = vpop.f32.mrf.mxu0
        %v734 = vadd.f32 0.0, %v733
        %v735 = vpop.f32.mrf.mxu0
        %v736 = vadd.f32 0.0, %v735
        %737 = vmatmul.bf16.gmra.mxu0 %v508
        %v738 = vpop.f32.mrf.mxu0
        %v739 = vadd.f32 0.0, %v738
        %v740 = vpop.f32.mrf.mxu0
        %v741 = vadd.f32 0.0, %v740
        %742 = vdwg.mxu0
        %743 = vmatpush.bf16.msra.mxu0 %v620
        %744 = vmatpush.bf16.msra.mxu0 %v617
        %745 = vmatpush.bf16.msra.mxu0 %v614
        %746 = vmatpush.bf16.msra.mxu0 %v611
        %747 = vmatpush.bf16.msra.mxu0 %v608
        %748 = vmatpush.bf16.msra.mxu0 %v605
        %749 = vmatpush.bf16.msra.mxu0 %v602
        %750 = vmatpush.bf16.msra.mxu0 %v599
        %751 = vmatmul.bf16.gmra.mxu0 %v501
        %v752 = vpop.f32.mrf.mxu0
        %v753 = vadd.f32 0.0, %v752
        %v754 = vpop.f32.mrf.mxu0
        %v755 = vadd.f32 0.0, %v754
        %756 = vmatmul.bf16.gmra.mxu0 %v502
        %v757 = vpop.f32.mrf.mxu0
        %v758 = vadd.f32 0.0, %v757
        %v759 = vpop.f32.mrf.mxu0
        %v760 = vadd.f32 0.0, %v759
        %761 = vmatmul.bf16.gmra.mxu0 %v503
        %v762 = vpop.f32.mrf.mxu0
        %v763 = vadd.f32 0.0, %v762
        %v764 = vpop.f32.mrf.mxu0
        %v765 = vadd.f32 0.0, %v764
        %766 = vmatmul.bf16.gmra.mxu0 %v504
        %v767 = vpop.f32.mrf.mxu0
        %v768 = vadd.f32 0.0, %v767
        %v769 = vpop.f32.mrf.mxu0
        %v770 = vadd.f32 0.0, %v769
        %771 = vmatmul.bf16.gmra.mxu0 %v505
        %v772 = vpop.f32.mrf.mxu0
        %v773 = vadd.f32 0.0, %v772
        %v774 = vpop.f32.mrf.mxu0
        %v775 = vadd.f32 0.0, %v774
        %776 = vmatmul.bf16.gmra.mxu0 %v506
        %v777 = vpop.f32.mrf.mxu0
        %v778 = vadd.f32 0.0, %v777
        %v779 = vpop.f32.mrf.mxu0
        %v780 = vadd.f32 0.0, %v779
        %781 = vmatmul.bf16.gmra.mxu0 %v507
        %v782 = vpop.f32.mrf.mxu0
        %v783 = vadd.f32 0.0, %v782
        %v784 = vpop.f32.mrf.mxu0
        %v785 = vadd.f32 0.0, %v784
        %786 = vmatmul.bf16.gmra.mxu0 %v508
        %v787 = vpop.f32.mrf.mxu0
        %v788 = vadd.f32 0.0, %v787
        %v789 = vpop.f32.mrf.mxu0
        %v790 = vadd.f32 0.0, %v789
        %791 = vdwg.mxu0
        %v792 = vmax.f32 %v655, %v704
        %v793 = vmax.f32 %v657, %v706
        %v794 = vmax.f32 %v660, %v709
        %v795 = vmax.f32 %v662, %v711
        %v796 = vmax.f32 %v665, %v714
        %v797 = vmax.f32 %v667, %v716
        %v798 = vmax.f32 %v670, %v719
        %v799 = vmax.f32 %v672, %v721
        %v800 = vmax.f32 %v675, %v724
        %v801 = vmax.f32 %v677, %v726
        %v802 = vmax.f32 %v680, %v729
        %v803 = vmax.f32 %v682, %v731
        %v804 = vmax.f32 %v685, %v734
        %v805 = vmax.f32 %v687, %v736
        %v806 = vmax.f32 %v690, %v739
        %v807 = vmax.f32 %v692, %v741
        %v808 = vmax.f32 %v792, %v753
        %v809 = vmax.f32 %v793, %v755
        %v810 = vmax.f32 %v794, %v758
        %v811 = vmax.f32 %v795, %v760
        %v812 = vmax.f32 %v796, %v763
        %v813 = vmax.f32 %v797, %v765
        %v814 = vmax.f32 %v798, %v768
        %v815 = vmax.f32 %v799, %v770
        %v816 = vmax.f32 %v800, %v773
        %v817 = vmax.f32 %v801, %v775
        %v818 = vmax.f32 %v802, %v778
        %v819 = vmax.f32 %v803, %v780
        %v820 = vmax.f32 %v804, %v783
        %v821 = vmax.f32 %v805, %v785
        %v822 = vmax.f32 %v806, %v788
        %v823 = vmax.f32 %v807, %v790
        %v824 = vld [vmem:[%s2] sm:$0x1]
        %v826 = vperm.slane %v824, 0
        %v828 = vadd.f32 %v808, %v826
        %v829 = vadd.f32 %v809, %v826
        %v830 = vadd.f32 %v810, %v826
        %v831 = vadd.f32 %v811, %v826
        %v832 = vadd.f32 %v812, %v826
        %v833 = vadd.f32 %v813, %v826
        %v834 = vadd.f32 %v814, %v826
        %v835 = vadd.f32 %v815, %v826
        %v836 = vadd.f32 %v816, %v826
        %v837 = vadd.f32 %v817, %v826
        %v838 = vadd.f32 %v818, %v826
        %v839 = vadd.f32 %v819, %v826
        %v840 = vadd.f32 %v820, %v826
        %v841 = vadd.f32 %v821, %v826
        %v842 = vadd.f32 %v822, %v826
        %v843 = vadd.f32 %v823, %v826
        %v844 = vpack.c.bf16 %v829, %v828
        %v845 = vpack.c.bf16 %v831, %v830
        %v846 = vpack.c.bf16 %v833, %v832
        %v847 = vpack.c.bf16 %v835, %v834
        %v848 = vpack.c.bf16 %v837, %v836
        %v849 = vpack.c.bf16 %v839, %v838
        %v850 = vpack.c.bf16 %v841, %v840
        %v851 = vpack.c.bf16 %v843, %v842
        %v852 = vld [vmem:[#allocation7] sm:$0xff]
        %v853 = vld [vmem:[#allocation7 + $0x8] sm:$0xf]
        %v854 = vld [vmem:[#allocation7 + $0xc] sm:$0xff]
        %v855 = vld [vmem:[#allocation7 + $0x14] sm:$0xf]
        %v856 = vld [vmem:[#allocation7 + $0x18] sm:$0xff]
        %v857 = vld [vmem:[#allocation7 + $0x20] sm:$0xf]
        %v858 = vld [vmem:[#allocation7 + $0x24] sm:$0xff]
        %v859 = vld [vmem:[#allocation7 + $0x2c] sm:$0xf]
        %v860 = vld [vmem:[#allocation7 + $0x30] sm:$0xff]
        %v861 = vld [vmem:[#allocation7 + $0x38] sm:$0xf]
        %v862 = vld [vmem:[#allocation7 + $0x3c] sm:$0xff]
        %v863 = vld [vmem:[#allocation7 + $0x44] sm:$0xf]
        %v864 = vld [vmem:[#allocation7 + $0x48] sm:$0xff]
        %v865 = vld [vmem:[#allocation7 + $0x50] sm:$0xf]
        %v866 = vld [vmem:[#allocation7 + $0x54] sm:$0xff]
        %v867 = vld [vmem:[#allocation7 + $0x5c] sm:$0xf]
        %v868 = vld [vmem:[#allocation7 + $0x60] sm:$0xff]
        %v869 = vld [vmem:[#allocation7 + $0x68] sm:$0xf]
        %v870 = vld [vmem:[#allocation7 + $0x6c] sm:$0xff]
        %v871 = vld [vmem:[#allocation7 + $0x74] sm:$0xf]
        %v872 = vld [vmem:[#allocation7 + $0x78] sm:$0xff]
        %v873 = vld [vmem:[#allocation7 + $0x80] sm:$0xf]
        %v874 = vld [vmem:[#allocation7 + $0x84] sm:$0xff]
        %v875 = vld [vmem:[#allocation7 + $0x8c] sm:$0xf]
        %v876 = vld [vmem:[#allocation7 + $0x90] sm:$0xff]
        %v877 = vld [vmem:[#allocation7 + $0x98] sm:$0xf]
        %v878 = vld [vmem:[#allocation7 + $0x9c] sm:$0xff]
        %v879 = vld [vmem:[#allocation7 + $0xa4] sm:$0xf]
        %v880 = vld [vmem:[#allocation7 + $0xa8] sm:$0xff]
        %v881 = vld [vmem:[#allocation7 + $0xb0] sm:$0xf]
        %v882 = vld [vmem:[#allocation7 + $0xb4] sm:$0xff]
        %v883 = vld [vmem:[#allocation7 + $0xbc] sm:$0xf]
        %v916 = vunpack.c.l.b16 %v852
        %v917 = vunpack.c.h.b16 %v852
        %v918 = vunpack.c.l.b16 %v853
        %v919 = vunpack.c.l.b16 %v854
        %v920 = vunpack.c.h.b16 %v854
        %v921 = vunpack.c.l.b16 %v855
        %v922 = vunpack.c.l.b16 %v856
        %v923 = vunpack.c.h.b16 %v856
        %v924 = vunpack.c.l.b16 %v857
        %v925 = vunpack.c.l.b16 %v858
        %v926 = vunpack.c.h.b16 %v858
        %v927 = vunpack.c.l.b16 %v859
        %v928 = vunpack.c.l.b16 %v860
        %v929 = vunpack.c.h.b16 %v860
        %v930 = vunpack.c.l.b16 %v861
        %v931 = vunpack.c.l.b16 %v862
        %v932 = vunpack.c.h.b16 %v862
        %v933 = vunpack.c.l.b16 %v863
        %v934 = vunpack.c.l.b16 %v864
        %v935 = vunpack.c.h.b16 %v864
        %v936 = vunpack.c.l.b16 %v865
        %v937 = vunpack.c.l.b16 %v866
        %v938 = vunpack.c.h.b16 %v866
        %v939 = vunpack.c.l.b16 %v867
        %v940 = vunpack.c.l.b16 %v868
        %v941 = vunpack.c.h.b16 %v868
        %v942 = vunpack.c.l.b16 %v869
        %v943 = vunpack.c.l.b16 %v870
        %v944 = vunpack.c.h.b16 %v870
        %v945 = vunpack.c.l.b16 %v871
        %v946 = vunpack.c.l.b16 %v872
        %v947 = vunpack.c.h.b16 %v872
        %v948 = vunpack.c.l.b16 %v873
        %v949 = vunpack.c.l.b16 %v874
        %v950 = vunpack.c.h.b16 %v874
        %v951 = vunpack.c.l.b16 %v875
        %v952 = vunpack.c.l.b16 %v876
        %v953 = vunpack.c.h.b16 %v876
        %v954 = vunpack.c.l.b16 %v877
        %v955 = vunpack.c.l.b16 %v878
        %v956 = vunpack.c.h.b16 %v878
        %v957 = vunpack.c.l.b16 %v879
        %v958 = vunpack.c.l.b16 %v880
        %v959 = vunpack.c.h.b16 %v880
        %v960 = vunpack.c.l.b16 %v881
        %v961 = vunpack.c.l.b16 %v882
        %v962 = vunpack.c.h.b16 %v882
        %v963 = vunpack.c.l.b16 %v883
        %v964 = vpack.c.b16 %v919, %v916
        %v965 = vpack.c.b16 %v920, %v917
        %v966 = vpack.c.b16 %v921, %v918
        %v967 = vpack.c.b16 %v925, %v922
        %v968 = vpack.c.b16 %v926, %v923
        %v969 = vpack.c.b16 %v927, %v924
        %v970 = vpack.c.b16 %v931, %v928
        %v971 = vpack.c.b16 %v932, %v929
        %v972 = vpack.c.b16 %v933, %v930
        %v973 = vpack.c.b16 %v937, %v934
        %v974 = vpack.c.b16 %v938, %v935
        %v975 = vpack.c.b16 %v939, %v936
        %v976 = vpack.c.b16 %v943, %v940
        %v977 = vpack.c.b16 %v944, %v941
        %v978 = vpack.c.b16 %v945, %v942
        %v979 = vpack.c.b16 %v949, %v946
        %v980 = vpack.c.b16 %v950, %v947
        %v981 = vpack.c.b16 %v951, %v948
        %v982 = vpack.c.b16 %v955, %v952
        %v983 = vpack.c.b16 %v956, %v953
        %v984 = vpack.c.b16 %v957, %v954
        %v985 = vpack.c.b16 %v961, %v958
        %v986 = vpack.c.b16 %v962, %v959
        %v987 = vpack.c.b16 %v963, %v960
        %1012 = vmatpush.bf16.msra.mxu0 %v985
        %1013 = vmatpush.bf16.msra.mxu0 %v982
        %1014 = vmatpush.bf16.msra.mxu0 %v979
        %1015 = vmatpush.bf16.msra.mxu0 %v976
        %1016 = vmatpush.bf16.msra.mxu0 %v973
        %1017 = vmatpush.bf16.msra.mxu0 %v970
        %1018 = vmatpush.bf16.msra.mxu0 %v967
        %1019 = vmatpush.bf16.msra.mxu0 %v964
        %1020 = vmatmul.bf16.gmra.mxu0 %v844
        %v1021 = vpop.f32.mrf.mxu0
        %v1022 = vadd.f32 0.0, %v1021
        %v1023 = vpop.f32.mrf.mxu0
        %v1024 = vadd.f32 0.0, %v1023
        %1025 = vmatmul.bf16.gmra.mxu0 %v845
        %v1026 = vpop.f32.mrf.mxu0
        %v1027 = vadd.f32 0.0, %v1026
        %v1028 = vpop.f32.mrf.mxu0
        %v1029 = vadd.f32 0.0, %v1028
        %1030 = vmatmul.bf16.gmra.mxu0 %v846
        %v1031 = vpop.f32.mrf.mxu0
        %v1032 = vadd.f32 0.0, %v1031
        %v1033 = vpop.f32.mrf.mxu0
        %v1034 = vadd.f32 0.0, %v1033
        %1035 = vmatmul.bf16.gmra.mxu0 %v847
        %v1036 = vpop.f32.mrf.mxu0
        %v1037 = vadd.f32 0.0, %v1036
        %v1038 = vpop.f32.mrf.mxu0
        %v1039 = vadd.f32 0.0, %v1038
        %1040 = vmatmul.bf16.gmra.mxu0 %v848
        %v1041 = vpop.f32.mrf.mxu0
        %v1042 = vadd.f32 0.0, %v1041
        %v1043 = vpop.f32.mrf.mxu0
        %v1044 = vadd.f32 0.0, %v1043
        %1045 = vmatmul.bf16.gmra.mxu0 %v849
        %v1046 = vpop.f32.mrf.mxu0
        %v1047 = vadd.f32 0.0, %v1046
        %v1048 = vpop.f32.mrf.mxu0
        %v1049 = vadd.f32 0.0, %v1048
        %1050 = vmatmul.bf16.gmra.mxu0 %v850
        %v1051 = vpop.f32.mrf.mxu0
        %v1052 = vadd.f32 0.0, %v1051
        %v1053 = vpop.f32.mrf.mxu0
        %v1054 = vadd.f32 0.0, %v1053
        %1055 = vmatmul.bf16.gmra.mxu0 %v851
        %v1056 = vpop.f32.mrf.mxu0
        %v1057 = vadd.f32 0.0, %v1056
        %v1058 = vpop.f32.mrf.mxu0
        %v1059 = vadd.f32 0.0, %v1058
        %1060 = vdwg.mxu0
        %1061 = vmatpush.bf16.msra.mxu0 %v986
        %1062 = vmatpush.bf16.msra.mxu0 %v983
        %1063 = vmatpush.bf16.msra.mxu0 %v980
        %1064 = vmatpush.bf16.msra.mxu0 %v977
        %1065 = vmatpush.bf16.msra.mxu0 %v974
        %1066 = vmatpush.bf16.msra.mxu0 %v971
        %1067 = vmatpush.bf16.msra.mxu0 %v968
        %1068 = vmatpush.bf16.msra.mxu0 %v965
        %1069 = vmatmul.bf16.gmra.mxu0 %v844
        %v1070 = vpop.f32.mrf.mxu0
        %v1071 = vadd.f32 0.0, %v1070
        %v1072 = vpop.f32.mrf.mxu0
        %v1073 = vadd.f32 0.0, %v1072
        %1074 = vmatmul.bf16.gmra.mxu0 %v845
        %v1075 = vpop.f32.mrf.mxu0
        %v1076 = vadd.f32 0.0, %v1075
        %v1077 = vpop.f32.mrf.mxu0
        %v1078 = vadd.f32 0.0, %v1077
        %1079 = vmatmul.bf16.gmra.mxu0 %v846
        %v1080 = vpop.f32.mrf.mxu0
        %v1081 = vadd.f32 0.0, %v1080
        %v1082 = vpop.f32.mrf.mxu0
        %v1083 = vadd.f32 0.0, %v1082
        %1084 = vmatmul.bf16.gmra.mxu0 %v847
        %v1085 = vpop.f32.mrf.mxu0
        %v1086 = vadd.f32 0.0, %v1085
        %v1087 = vpop.f32.mrf.mxu0
        %v1088 = vadd.f32 0.0, %v1087
        %1089 = vmatmul.bf16.gmra.mxu0 %v848
        %v1090 = vpop.f32.mrf.mxu0
        %v1091 = vadd.f32 0.0, %v1090
        %v1092 = vpop.f32.mrf.mxu0
        %v1093 = vadd.f32 0.0, %v1092
        %1094 = vmatmul.bf16.gmra.mxu0 %v849
        %v1095 = vpop.f32.mrf.mxu0
        %v1096 = vadd.f32 0.0, %v1095
        %v1097 = vpop.f32.mrf.mxu0
        %v1098 = vadd.f32 0.0, %v1097
        %1099 = vmatmul.bf16.gmra.mxu0 %v850
        %v1100 = vpop.f32.mrf.mxu0
        %v1101 = vadd.f32 0.0, %v1100
        %v1102 = vpop.f32.mrf.mxu0
        %v1103 = vadd.f32 0.0, %v1102
        %1104 = vmatmul.bf16.gmra.mxu0 %v851
        %v1105 = vpop.f32.mrf.mxu0
        %v1106 = vadd.f32 0.0, %v1105
        %v1107 = vpop.f32.mrf.mxu0
        %v1108 = vadd.f32 0.0, %v1107
        %1109 = vdwg.mxu0
        %1110 = vmatpush.bf16.msra.mxu0 %v987
        %1111 = vmatpush.bf16.msra.mxu0 %v984
        %1112 = vmatpush.bf16.msra.mxu0 %v981
        %1113 = vmatpush.bf16.msra.mxu0 %v978
        %1114 = vmatpush.bf16.msra.mxu0 %v975
        %1115 = vmatpush.bf16.msra.mxu0 %v972
        %1116 = vmatpush.bf16.msra.mxu0 %v969
        %1117 = vmatpush.bf16.msra.mxu0 %v966
        %1118 = vmatmul.bf16.gmra.mxu0 %v844
        %v1119 = vpop.f32.mrf.mxu0
        %v1120 = vadd.f32 0.0, %v1119
        %v1121 = vpop.f32.mrf.mxu0
        %v1122 = vadd.f32 0.0, %v1121
        %1123 = vmatmul.bf16.gmra.mxu0 %v845
        %v1124 = vpop.f32.mrf.mxu0
        %v1125 = vadd.f32 0.0, %v1124
        %v1126 = vpop.f32.mrf.mxu0
        %v1127 = vadd.f32 0.0, %v1126
        %1128 = vmatmul.bf16.gmra.mxu0 %v846
        %v1129 = vpop.f32.mrf.mxu0
        %v1130 = vadd.f32 0.0, %v1129
        %v1131 = vpop.f32.mrf.mxu0
        %v1132 = vadd.f32 0.0, %v1131
        %1133 = vmatmul.bf16.gmra.mxu0 %v847
        %v1134 = vpop.f32.mrf.mxu0
        %v1135 = vadd.f32 0.0, %v1134
        %v1136 = vpop.f32.mrf.mxu0
        %v1137 = vadd.f32 0.0, %v1136
        %1138 = vmatmul.bf16.gmra.mxu0 %v848
        %v1139 = vpop.f32.mrf.mxu0
        %v1140 = vadd.f32 0.0, %v1139
        %v1141 = vpop.f32.mrf.mxu0
        %v1142 = vadd.f32 0.0, %v1141
        %1143 = vmatmul.bf16.gmra.mxu0 %v849
        %v1144 = vpop.f32.mrf.mxu0
        %v1145 = vadd.f32 0.0, %v1144
        %v1146 = vpop.f32.mrf.mxu0
        %v1147 = vadd.f32 0.0, %v1146
        %1148 = vmatmul.bf16.gmra.mxu0 %v850
        %v1149 = vpop.f32.mrf.mxu0
        %v1150 = vadd.f32 0.0, %v1149
        %v1151 = vpop.f32.mrf.mxu0
        %v1152 = vadd.f32 0.0, %v1151
        %1153 = vmatmul.bf16.gmra.mxu0 %v851
        %v1154 = vpop.f32.mrf.mxu0
        %v1155 = vadd.f32 0.0, %v1154
        %v1156 = vpop.f32.mrf.mxu0
        %v1157 = vadd.f32 0.0, %v1156
        %1158 = vdwg.mxu0
        %v1159 = vmax.f32 %v1022, %v1071
        %v1160 = vmax.f32 %v1024, %v1073
        %v1161 = vmax.f32 %v1027, %v1076
        %v1162 = vmax.f32 %v1029, %v1078
        %v1163 = vmax.f32 %v1032, %v1081
        %v1164 = vmax.f32 %v1034, %v1083
        %v1165 = vmax.f32 %v1037, %v1086
        %v1166 = vmax.f32 %v1039, %v1088
        %v1167 = vmax.f32 %v1042, %v1091
        %v1168 = vmax.f32 %v1044, %v1093
        %v1169 = vmax.f32 %v1047, %v1096
        %v1170 = vmax.f32 %v1049, %v1098
        %v1171 = vmax.f32 %v1052, %v1101
        %v1172 = vmax.f32 %v1054, %v1103
        %v1173 = vmax.f32 %v1057, %v1106
        %v1174 = vmax.f32 %v1059, %v1108
        %v1175 = vmax.f32 %v1159, %v1120
        %v1176 = vmax.f32 %v1160, %v1122
        %v1177 = vmax.f32 %v1161, %v1125
        %v1178 = vmax.f32 %v1162, %v1127
        %v1179 = vmax.f32 %v1163, %v1130
        %v1180 = vmax.f32 %v1164, %v1132
        %v1181 = vmax.f32 %v1165, %v1135
        %v1182 = vmax.f32 %v1166, %v1137
        %v1183 = vmax.f32 %v1167, %v1140
        %v1184 = vmax.f32 %v1168, %v1142
        %v1185 = vmax.f32 %v1169, %v1145
        %v1186 = vmax.f32 %v1170, %v1147
        %v1187 = vmax.f32 %v1171, %v1150
        %v1188 = vmax.f32 %v1172, %v1152
        %v1189 = vmax.f32 %v1173, %v1155
        %v1190 = vmax.f32 %v1174, %v1157
        %v1191 = vld [vmem:[%s4] sm:$0x1]
        %v1193 = vperm.slane %v1191, 0
        %v1195 = vadd.f32 %v1175, %v1193
        %v1196 = vadd.f32 %v1176, %v1193
        %v1197 = vadd.f32 %v1177, %v1193
        %v1198 = vadd.f32 %v1178, %v1193
        %v1199 = vadd.f32 %v1179, %v1193
        %v1200 = vadd.f32 %v1180, %v1193
        %v1201 = vadd.f32 %v1181, %v1193
        %v1202 = vadd.f32 %v1182, %v1193
        %v1203 = vadd.f32 %v1183, %v1193
        %v1204 = vadd.f32 %v1184, %v1193
        %v1205 = vadd.f32 %v1185, %v1193
        %v1206 = vadd.f32 %v1186, %v1193
        %v1207 = vadd.f32 %v1187, %v1193
        %v1208 = vadd.f32 %v1188, %v1193
        %v1209 = vadd.f32 %v1189, %v1193
        %v1210 = vadd.f32 %v1190, %v1193
        %v1211 = vpack.c.bf16 %v1196, %v1195
        %v1212 = vpack.c.bf16 %v1198, %v1197
        %v1213 = vpack.c.bf16 %v1200, %v1199
        %v1214 = vpack.c.bf16 %v1202, %v1201
        %v1215 = vpack.c.bf16 %v1204, %v1203
        %v1216 = vpack.c.bf16 %v1206, %v1205
        %v1217 = vpack.c.bf16 %v1208, %v1207
        %v1218 = vpack.c.bf16 %v1210, %v1209
        %v1219 = vld [vmem:[#allocation8] sm:$0xf]
        %v1220 = vld [vmem:[#allocation8 + $0x4] sm:$0xf]
        %v1221 = vld [vmem:[#allocation8 + $0x8] sm:$0xf]
        %v1222 = vld [vmem:[#allocation8 + $0xc] sm:$0xf]
        %v1223 = vld [vmem:[#allocation8 + $0x10] sm:$0xf]
        %v1224 = vld [vmem:[#allocation8 + $0x14] sm:$0xf]
        %v1225 = vld [vmem:[#allocation8 + $0x18] sm:$0xf]
        %v1226 = vld [vmem:[#allocation8 + $0x1c] sm:$0xf]
        %v1227 = vld [vmem:[#allocation8 + $0x20] sm:$0xf]
        %v1228 = vld [vmem:[#allocation8 + $0x24] sm:$0xf]
        %v1229 = vld [vmem:[#allocation8 + $0x28] sm:$0xf]
        %v1230 = vld [vmem:[#allocation8 + $0x2c] sm:$0xf]
        %v1231 = vld [vmem:[#allocation8 + $0x30] sm:$0xf]
        %v1232 = vld [vmem:[#allocation8 + $0x34] sm:$0xf]
        %v1233 = vld [vmem:[#allocation8 + $0x38] sm:$0xf]
        %v1234 = vld [vmem:[#allocation8 + $0x3c] sm:$0xf]
        %v1235 = vld [vmem:[%s6] sm:$0x1]
        %v1237 = vperm.slane %v1235, 0
        %v1255 = vunpack.c.l.b16 %v1219
        %v1256 = vunpack.c.l.b16 %v1220
        %v1257 = vunpack.c.l.b16 %v1221
        %v1258 = vunpack.c.l.b16 %v1222
        %v1259 = vunpack.c.l.b16 %v1223
        %v1260 = vunpack.c.l.b16 %v1224
        %v1261 = vunpack.c.l.b16 %v1225
        %v1262 = vunpack.c.l.b16 %v1226
        %v1263 = vunpack.c.l.b16 %v1227
        %v1264 = vunpack.c.l.b16 %v1228
        %v1265 = vunpack.c.l.b16 %v1229
        %v1266 = vunpack.c.l.b16 %v1230
        %v1267 = vunpack.c.l.b16 %v1231
        %v1268 = vunpack.c.l.b16 %v1232
        %v1269 = vunpack.c.l.b16 %v1233
        %v1270 = vunpack.c.l.b16 %v1234
        %v1271 = vpack.c.b16 %v1256, %v1255
        %v1272 = vpack.c.b16 %v1258, %v1257
        %v1273 = vpack.c.b16 %v1260, %v1259
        %v1274 = vpack.c.b16 %v1262, %v1261
        %v1275 = vpack.c.b16 %v1264, %v1263
        %v1276 = vpack.c.b16 %v1266, %v1265
        %v1277 = vpack.c.b16 %v1268, %v1267
        %v1278 = vpack.c.b16 %v1270, %v1269
        %1287 = vmatpush.bf16.msra.mxu0 %v1278
        %1288 = vmatpush.bf16.msra.mxu0 %v1277
        %1289 = vmatpush.bf16.msra.mxu0 %v1276
        %1290 = vmatpush.bf16.msra.mxu0 %v1275
        %1291 = vmatpush.bf16.msra.mxu0 %v1274
        %1292 = vmatpush.bf16.msra.mxu0 %v1273
        %1293 = vmatpush.bf16.msra.mxu0 %v1272
        %1294 = vmatpush.bf16.msra.mxu0 %v1271
        %1295 = vmatmul.bf16.gmra.mxu0 %v1211
        %v1296 = vpop.f32.mrf.mxu0
        %v1297 = vadd.f32 %v1237, %v1296
        %v1298 = vpop.f32.mrf.mxu0
        %v1299 = vadd.f32 %v1237, %v1298
        %1300 = vmatmul.bf16.gmra.mxu0 %v1212
        %v1301 = vpop.f32.mrf.mxu0
        %v1302 = vadd.f32 %v1237, %v1301
        %v1303 = vpop.f32.mrf.mxu0
        %v1304 = vadd.f32 %v1237, %v1303
        %1305 = vmatmul.bf16.gmra.mxu0 %v1213
        %v1306 = vpop.f32.mrf.mxu0
        %v1307 = vadd.f32 %v1237, %v1306
        %v1308 = vpop.f32.mrf.mxu0
        %v1309 = vadd.f32 %v1237, %v1308
        %1310 = vmatmul.bf16.gmra.mxu0 %v1214
        %v1311 = vpop.f32.mrf.mxu0
        %v1312 = vadd.f32 %v1237, %v1311
        %v1313 = vpop.f32.mrf.mxu0
        %v1314 = vadd.f32 %v1237, %v1313
        %1315 = vmatmul.bf16.gmra.mxu0 %v1215
        %v1316 = vpop.f32.mrf.mxu0
        %v1317 = vadd.f32 %v1237, %v1316
        %v1318 = vpop.f32.mrf.mxu0
        %v1319 = vadd.f32 %v1237, %v1318
        %1320 = vmatmul.bf16.gmra.mxu0 %v1216
        %v1321 = vpop.f32.mrf.mxu0
        %v1322 = vadd.f32 %v1237, %v1321
        %v1323 = vpop.f32.mrf.mxu0
        %v1324 = vadd.f32 %v1237, %v1323
        %1325 = vmatmul.bf16.gmra.mxu0 %v1217
        %v1326 = vpop.f32.mrf.mxu0
        %v1327 = vadd.f32 %v1237, %v1326
        %v1328 = vpop.f32.mrf.mxu0
        %v1329 = vadd.f32 %v1237, %v1328
        %1330 = vmatmul.bf16.gmra.mxu0 %v1218
        %v1331 = vpop.f32.mrf.mxu0
        %v1332 = vadd.f32 %v1237, %v1331
        %v1333 = vpop.f32.mrf.mxu0
        %v1334 = vadd.f32 %v1237, %v1333
        %1335 = vdwg.mxu0
        %v1336 = vmax.f32 %v1297, 0.0
        %v1337 = vmax.f32 %v1299, 0.0
        %v1338 = vmax.f32 %v1302, 0.0
        %v1339 = vmax.f32 %v1304, 0.0
        %v1340 = vmax.f32 %v1307, 0.0
        %v1341 = vmax.f32 %v1309, 0.0
        %v1342 = vmax.f32 %v1312, 0.0
        %v1343 = vmax.f32 %v1314, 0.0
        %v1344 = vmax.f32 %v1317, 0.0
        %v1345 = vmax.f32 %v1319, 0.0
        %v1346 = vmax.f32 %v1322, 0.0
        %v1347 = vmax.f32 %v1324, 0.0
        %v1348 = vmax.f32 %v1327, 0.0
        %v1349 = vmax.f32 %v1329, 0.0
        %v1350 = vmax.f32 %v1332, 0.0
        %v1351 = vmax.f32 %v1334, 0.0
        %v1352 = vpack.c.bf16 %v1337, %v1336
        %v1353 = vpack.c.bf16 %v1339, %v1338
        %v1354 = vpack.c.bf16 %v1341, %v1340
        %v1355 = vpack.c.bf16 %v1343, %v1342
        %v1356 = vpack.c.bf16 %v1345, %v1344
        %v1357 = vpack.c.bf16 %v1347, %v1346
        %v1358 = vpack.c.bf16 %v1349, %v1348
        %v1359 = vpack.c.bf16 %v1351, %v1350
        %v1360 = vld [vmem:[#allocation10] sm:$0xf]
        %v1361 = vld [vmem:[#allocation10 + $0x4] sm:$0xf]
        %v1362 = vld [vmem:[#allocation10 + $0x8] sm:$0xf]
        %v1363 = vld [vmem:[#allocation10 + $0xc] sm:$0xf]
        %v1364 = vld [vmem:[#allocation10 + $0x10] sm:$0xf]
        %v1365 = vld [vmem:[#allocation10 + $0x14] sm:$0xf]
        %v1366 = vld [vmem:[#allocation10 + $0x18] sm:$0xf]
        %v1367 = vld [vmem:[#allocation10 + $0x1c] sm:$0xf]
        %v1368 = vld [vmem:[#allocation10 + $0x20] sm:$0xf]
        %v1369 = vld [vmem:[#allocation10 + $0x24] sm:$0xf]
        %v1370 = vld [vmem:[#allocation10 + $0x28] sm:$0xf]
        %v1371 = vld [vmem:[#allocation10 + $0x2c] sm:$0xf]
        %v1372 = vld [vmem:[#allocation10 + $0x30] sm:$0xf]
        %v1373 = vld [vmem:[#allocation10 + $0x34] sm:$0xf]
        %v1374 = vld [vmem:[#allocation10 + $0x38] sm:$0xf]
        %v1375 = vld [vmem:[#allocation10 + $0x3c] sm:$0xf]
        %v1376 = vld [vmem:[%s8] sm:$0x1]
        %v1378 = vperm.slane %v1376, 0
        %v1396 = vunpack.c.l.b16 %v1360
        %v1397 = vunpack.c.l.b16 %v1361
        %v1398 = vunpack.c.l.b16 %v1362
        %v1399 = vunpack.c.l.b16 %v1363
        %v1400 = vunpack.c.l.b16 %v1364
        %v1401 = vunpack.c.l.b16 %v1365
        %v1402 = vunpack.c.l.b16 %v1366
        %v1403 = vunpack.c.l.b16 %v1367
        %v1404 = vunpack.c.l.b16 %v1368
        %v1405 = vunpack.c.l.b16 %v1369
        %v1406 = vunpack.c.l.b16 %v1370
        %v1407 = vunpack.c.l.b16 %v1371
        %v1408 = vunpack.c.l.b16 %v1372
        %v1409 = vunpack.c.l.b16 %v1373
        %v1410 = vunpack.c.l.b16 %v1374
        %v1411 = vunpack.c.l.b16 %v1375
        %v1412 = vpack.c.b16 %v1397, %v1396
        %v1413 = vpack.c.b16 %v1399, %v1398
        %v1414 = vpack.c.b16 %v1401, %v1400
        %v1415 = vpack.c.b16 %v1403, %v1402
        %v1416 = vpack.c.b16 %v1405, %v1404
        %v1417 = vpack.c.b16 %v1407, %v1406
        %v1418 = vpack.c.b16 %v1409, %v1408
        %v1419 = vpack.c.b16 %v1411, %v1410
        %1428 = vmatpush.bf16.msra.mxu0 %v1419
        %1429 = vmatpush.bf16.msra.mxu0 %v1418
        %1430 = vmatpush.bf16.msra.mxu0 %v1417
        %1431 = vmatpush.bf16.msra.mxu0 %v1416
        %1432 = vmatpush.bf16.msra.mxu0 %v1415
        %1433 = vmatpush.bf16.msra.mxu0 %v1414
        %1434 = vmatpush.bf16.msra.mxu0 %v1413
        %1435 = vmatpush.bf16.msra.mxu0 %v1412
        %1436 = vmatmul.bf16.gmra.mxu0 %v1352
        %v1437 = vpop.f32.mrf.mxu0
        %v1438 = vadd.f32 %v1378, %v1437
        %v1439 = vpop.f32.mrf.mxu0
        %v1440 = vadd.f32 %v1378, %v1439
        %1441 = vmatmul.bf16.gmra.mxu0 %v1353
        %v1442 = vpop.f32.mrf.mxu0
        %v1443 = vadd.f32 %v1378, %v1442
        %v1444 = vpop.f32.mrf.mxu0
        %v1445 = vadd.f32 %v1378, %v1444
        %1446 = vmatmul.bf16.gmra.mxu0 %v1354
        %v1447 = vpop.f32.mrf.mxu0
        %v1448 = vadd.f32 %v1378, %v1447
        %v1449 = vpop.f32.mrf.mxu0
        %v1450 = vadd.f32 %v1378, %v1449
        %1451 = vmatmul.bf16.gmra.mxu0 %v1355
        %v1452 = vpop.f32.mrf.mxu0
        %v1453 = vadd.f32 %v1378, %v1452
        %v1454 = vpop.f32.mrf.mxu0
        %v1455 = vadd.f32 %v1378, %v1454
        %1456 = vmatmul.bf16.gmra.mxu0 %v1356
        %v1457 = vpop.f32.mrf.mxu0
        %v1458 = vadd.f32 %v1378, %v1457
        %v1459 = vpop.f32.mrf.mxu0
        %v1460 = vadd.f32 %v1378, %v1459
        %1461 = vmatmul.bf16.gmra.mxu0 %v1357
        %v1462 = vpop.f32.mrf.mxu0
        %v1463 = vadd.f32 %v1378, %v1462
        %v1464 = vpop.f32.mrf.mxu0
        %v1465 = vadd.f32 %v1378, %v1464
        %1466 = vmatmul.bf16.gmra.mxu0 %v1358
        %v1467 = vpop.f32.mrf.mxu0
        %v1468 = vadd.f32 %v1378, %v1467
        %v1469 = vpop.f32.mrf.mxu0
        %v1470 = vadd.f32 %v1378, %v1469
        %1471 = vmatmul.bf16.gmra.mxu0 %v1359
        %v1472 = vpop.f32.mrf.mxu0
        %v1473 = vadd.f32 %v1378, %v1472
        %v1474 = vpop.f32.mrf.mxu0
        %v1475 = vadd.f32 %v1378, %v1474
        %1476 = vdwg.mxu0
        %1477 = vst [vmem:[%s418] sm:$0xff] %v1438
        %1478 = vst [vmem:[%s418 + $0x8] sm:$0xff] %v1440
        %1479 = vst [vmem:[%s418 + $0x10] sm:$0xff] %v1443
        %1480 = vst [vmem:[%s418 + $0x18] sm:$0xff] %v1445
        %1481 = vst [vmem:[%s418 + $0x20] sm:$0xff] %v1448
        %1482 = vst [vmem:[%s418 + $0x28] sm:$0xff] %v1450
        %1483 = vst [vmem:[%s418 + $0x30] sm:$0xff] %v1453
        %1484 = vst [vmem:[%s418 + $0x38] sm:$0xff] %v1455
        %1485 = vst [vmem:[%s418 + $0x40] sm:$0xff] %v1458
        %1486 = vst [vmem:[%s418 + $0x48] sm:$0xff] %v1460
        %1487 = vst [vmem:[%s418 + $0x50] sm:$0xff] %v1463
        %1488 = vst [vmem:[%s418 + $0x58] sm:$0xff] %v1465
        %1489 = vst [vmem:[%s418 + $0x60] sm:$0xff] %v1468
        %1490 = vst [vmem:[%s418 + $0x68] sm:$0xff] %v1470
        %1491 = vst [vmem:[%s418 + $0x70] sm:$0xff] %v1473
        %1492 = vst [vmem:[%s418 + $0x78] sm:$0xff] %v1475
        %s1493 = sand.u32 %s230, 1
        %s1494 = scalar_lea.sflag [#allocation4], %s1493
        %s1495 = sand.u32 %s230, 1
        %s1496 = smul.addr %s1495, 128
        %s1497 = scalar_lea.vmem [#allocation11], %s1496
        // Predicated region
        $region77: #{tpu_custom_call.1} parent=55 // pred_check
          %p1498 = pneg %p240
        $region78: #{tpu_custom_call.1} parent=55 // pred_check_branch
          %1500 = sbr.rel (%p1498) target = $region80
        $region79: #{tpu_custom_call.1} parent=55 // pred_region
          %s1501 = smul.u32 16, %s28
          %1503 = vsyncadd %s1494, 0
          %s1504 = smul.addr %s1501, 8
          %s1505 = scalar_lea.hbm %s9, %s1504
          %s1506 = sshll.u32 %s1497, 4
          %s1507 = int_to_ptr.vmem [resolvable:$true] %s1506
          %s1508 = sshll.u32 %s1505, 4
          %s1509 = int_to_ptr.hbm [resolvable:$true] %s1508
          %1514 = dma.vmem_to_hbm [thread:$0]  %s1507, 2048, %s1509, %s1494, 128, 128, 8
        $region80: #{tpu_custom_call.1} parent=55 // pred_fallthru
          _
      $region56: #{tpu_custom_call.1} parent=5 // pred_fallthru
        _
      %p1515 = scmp.le.s32.totalorder 2, %s23
      // Predicated region
      $region81: #{tpu_custom_call.1} parent=5 // pred_check
        %p1516 = pneg %p1515
      $region82: #{tpu_custom_call.1} parent=5 // pred_check_branch
        %1518 = sbr.rel (%p1516) target = $region84
      $region83: #{tpu_custom_call.1} parent=5 // pred_region
        %s1519 = ssub.s32 %s23, 2
        // Predicated region
        $region85: #{tpu_custom_call.1} parent=83 // pred_check
          %p1520 = pneg %p246
        $region86: #{tpu_custom_call.1} parent=83 // pred_check_branch
          %1522 = sbr.rel (%p1520) target = $region88
        $region87: #{tpu_custom_call.1} parent=83 // pred_region
          %s1523 = sand.u32 %s231, 1
          %s1524 = scalar_lea.sflag [#allocation4], %s1523
          %s1525 = sand.u32 %s231, 1
          %s1526 = smul.addr %s1525, 128
          %s1527 = scalar_lea.vmem [#allocation11], %s1526
          %1529 = dma.done %s1524, 2048
        $region88: #{tpu_custom_call.1} parent=83 // pred_fallthru
          _
      $region84: #{tpu_custom_call.1} parent=5 // pred_fallthru
        _
    $region6: #{tpu_custom_call.1} parent=1 // loop_footer
      %s27 = sadd.s32 1, %s23
    $region7: #{tpu_custom_call.1} parent=1 // loop_footer_branch
      %22 = sbr.rel target = $region3
    $region8: #{tpu_custom_call.1} parent=1 // loop_exit
      _
    %1530 = vsyncpa [#allocation3], 1
    %s1531 = scalar_lea.sflag [#allocation3], 1
    %1532 = vsyncpa %s1531, 1
    %1533 = vsyncpa [#allocation6], 1
    %1534 = vsyncpa [#allocation9], 1
    %1535 = vsyncpa [#allocation4], 1
    %s1536 = scalar_lea.sflag [#allocation4], 1
    %1537 = vsyncpa %s1536, 1

</llo_original>
